<compile_context>
chip_gen: v7x
topology: tpu7x:2x2x1
jax: 0.10.0
libtpu: 0.0.40
codegen_flags: <defaults>
</compile_context>

<pallas_src>
import math

import jax
import jax.numpy as jnp
from jax.experimental import pallas as pl
from jax.experimental.pallas import tpu as pltpu


SMALL_SETTINGS = {
    'layers': 3,
    'blocks': 2,
    'dilation_channels': 8,
    'residual_channels': 8,
    'skip_channels': 16,
    'end_channels': [16, 8],
    'output_channels': 1,
    'output_length': 8,
    'kernel_size': 2,
    'dilation_factor': 2,
    'bias': True,
}

_LANES = 128


# ----------------------------- fused Pallas kernel ---------------------------

def _build_fused_kernel(plan, tc, dc, sc, oc):
    """Single fused forward kernel on a fixed right-aligned (C, tc) canvas.

    plan: tuple of (flat_stride, flat_front_pad, valid_len_at_entry) per layer,
          computed statically (mirrors the reference dilate()).
    Layout: channels on sublanes, time on lanes; the valid stream occupies the
    trailing `valid_len` lanes of the canvas, so it never moves across layers
    and the trailing output_length lanes are at a fixed position.
    """
    need_mask = any(p for _, p, _ in plan)

    def kernel(x_ref, sw_ref, sb_ref,
               w0_ref, w1_ref, bfg_ref, wsr_ref, bsr_ref,
               ew1_ref, eb1_ref, ew2_ref, eb2_ref, ew3_ref, eb3_ref,
               out_ref):
        # start 1x1 conv (in_channels == 1): broadcast mul + add, no MXU.
        h = sw_ref[...] * x_ref[...] + sb_ref[...]              # (RC, tc) f32

        lane = (jax.lax.broadcasted_iota(jnp.int32, (1, tc), 1)
                if need_mask else None)

        skip = None
        for i, (d, pad, t_in) in enumerate(plan):               # static unroll
            if pad:
                # dilate() prepends `pad` zeros to the flat stream.  On the
                # right-aligned canvas it suffices to zero everything left of
                # the valid region (one VPU select, only on pad layers).
                h = jnp.where(lane >= tc - t_in, h, 0.0)
            # kernel-size-2 dilated conv, right-aligned canvas form:
            #   out[:, c] = W_tap0 @ h[:, c - d] + W_tap1 @ h[:, c]
            # Shifted operand via an XLU lane rotate; the wrap-around only
            # lands in columns left of the valid region, never consumed by
            # valid outputs.
            h_prev = pltpu.roll(h, d, axis=1)                   # [:, c] <- h[:, c-d]
            fg = (jnp.dot(w0_ref[i], h_prev.astype(jnp.bfloat16),
                          preferred_element_type=jnp.float32)
                  + jnp.dot(w1_ref[i], h.astype(jnp.bfloat16),
                            preferred_element_type=jnp.float32)
                  + bfg_ref[i])                                 # (2DC, tc) f32
            # gated activation: f32 on VPU/EUP (bf16 only at the MXU boundary).
            act = jnp.tanh(fg[:dc]) * jax.nn.sigmoid(fg[dc:])   # (DC, tc) f32
            # skip 1x1 conv + residual 1x1 conv fused into ONE MXU dot.
            sr = (jnp.dot(wsr_ref[i], act.astype(jnp.bfloat16),
                          preferred_element_type=jnp.float32)
                  + bsr_ref[i])                                 # (SC+RC, tc)
            # fixed-layout skip accumulation (head reads trailing lanes only).
            skip = sr[:sc] if skip is None else skip + sr[:sc]
            # residual add: flat h[d:] lands on the SAME canvas column.
            h = sr[sc:] + h

        # end head: relu -> 1x1 conv chain, pointwise on the lane-dense
        # canvas; the wrapper slices the trailing output_length lanes.
        y = jnp.maximum(skip, 0.0)
        y = (jnp.dot(ew1_ref[...], y.astype(jnp.bfloat16),
                     preferred_element_type=jnp.float32) + eb1_ref[...])
        y = jnp.maximum(y, 0.0)
        y = (jnp.dot(ew2_ref[...], y.astype(jnp.bfloat16),
                     preferred_element_type=jnp.float32) + eb2_ref[...])
        y = jnp.maximum(y, 0.0)
        if oc == 1:
            # single-output-channel conv as a VPU mul + sublane reduce
            out = jnp.sum(ew3_ref[...] * y, axis=0, keepdims=True) + eb3_ref[...]
        else:
            out = (jnp.dot(ew3_ref[...], y.astype(jnp.bfloat16),
                           preferred_element_type=jnp.float32) + eb3_ref[...])
        out_ref[...] = out

    return kernel


def _uniform(key, shape, bound):
    return jax.random.uniform(key, shape, jnp.float32, -bound, bound)


# ---------------------------------- model ------------------------------------

class WaveNetModelPallas:
    def __init__(self, args_dict, key):
        self.layers = args_dict['layers']
        self.blocks = args_dict['blocks']
        self.dilation_channels = args_dict['dilation_channels']
        self.residual_channels = args_dict['residual_channels']
        self.skip_channels = args_dict['skip_channels']
        self.end_channels = args_dict['end_channels']
        self.output_channels = args_dict['output_channels']
        self.output_length = args_dict['output_length']
        self.kernel_size = args_dict['kernel_size']
        self.dilation_factor = args_dict['dilation_factor']
        assert self.kernel_size == 2       # 2-tap fused conv
        assert self.dilation_factor == 2   # dilate()'s pad-by-1 quirk only exact here
        assert len(self.end_channels) == 2

        rc, dc, sc = (self.residual_channels, self.dilation_channels,
                      self.skip_channels)
        ec1, ec2 = self.end_channels
        oc = self.output_channels
        n_units = self.blocks * self.layers

        # dilation schedule + receptive field (mirrors the reference loop)
        receptive_field = 1
        init_dilation = 1
        self.dilations = []
        for _b in range(self.blocks):
            additional_scope = self.kernel_size - 1
            new_dilation = 1
            for _i in range(self.layers):
                self.dilations.append((new_dilation, init_dilation))
                receptive_field += additional_scope
                additional_scope *= self.dilation_factor
                init_dilation = new_dilation
                new_dilation *= self.dilation_factor
        self.receptive_field = receptive_field

        # ---- parameters: torch Conv1d default init U(+-1/sqrt(fan_in*k)),
        # stored pre-transposed as (out_ch, in_ch) matrices, per-layer weights
        # stacked along a leading layer axis.  MXU-side weights live in bf16
        # (f32 accumulation via preferred_element_type); biases stay f32. ----
        keys = iter(jax.random.split(key, 2 + 5 * n_units + 6))

        b_start = 1.0 / math.sqrt(1 * 1)
        self.start_w = _uniform(next(keys), (rc, 1), b_start)
        self.start_b = _uniform(next(keys), (rc, 1), b_start)

        b_fg = 1.0 / math.sqrt(rc * self.kernel_size)
        b_sr = 1.0 / math.sqrt(dc * 1)
        w0, w1, bfg, wsr, bsr = [], [], [], [], []
        for _ in range(n_units):
            # tap-0 / tap-1 weights, filter stacked on gate: (2*DC, RC) each
            w0.append(_uniform(next(keys), (2 * dc, rc), b_fg))
            w1.append(_uniform(next(keys), (2 * dc, rc), b_fg))
            bfg.append(_uniform(next(keys), (2 * dc, 1), b_fg))
            # [Wskip ; Wres]  -> (SC + RC, DC)
            wsr.append(_uniform(next(keys), (sc + rc, dc), b_sr))
            bsr.append(_uniform(next(keys), (sc + rc, 1), b_sr))
        self.wfg0 = jnp.stack(w0).astype(jnp.bfloat16)
        self.wfg1 = jnp.stack(w1).astype(jnp.bfloat16)
        self.bfg = jnp.stack(bfg)
        self.wsr = jnp.stack(wsr).astype(jnp.bfloat16)
        self.bsr = jnp.stack(bsr)

        b1 = 1.0 / math.sqrt(sc)
        b2 = 1.0 / math.sqrt(ec1)
        b3 = 1.0 / math.sqrt(ec2)
        self.end_w1 = _uniform(next(keys), (ec1, sc), b1).astype(jnp.bfloat16)
        self.end_b1 = _uniform(next(keys), (ec1, 1), b1)
        self.end_w2 = _uniform(next(keys), (ec2, ec1), b2).astype(jnp.bfloat16)
        self.end_b2 = _uniform(next(keys), (ec2, 1), b2)
        if oc == 1:
            self.end_w3 = _uniform(next(keys), (ec2, 1), b3)   # f32 column, VPU path
        else:
            self.end_w3 = _uniform(next(keys), (oc, ec2), b3).astype(jnp.bfloat16)
        self.end_b3 = _uniform(next(keys), (oc, 1), b3)

    @property
    def input_length(self):
        return self.receptive_field + self.output_length - 1

    def _plan(self, t0):
        """Static per-layer (flat stride, flat front pad, valid len at entry)."""
        plan = []
        t = t0
        for (d, idil) in self.dilations:
            pad = 0
            if d > idil:                      # up-dilation (factor 2 here)
                df = d // idil
                layout_len = t // idil
                if layout_len % df != 0:
                    pad = idil                # dilate() pads exactly one column
            plan.append((d, pad, t))
            t = t + pad - d
        return tuple(plan), t

    def _cost_estimate(self, n_layers, tc, inputs):
        rc, dc, sc = (self.residual_channels, self.dilation_channels,
                      self.skip_channels)
        ec1, ec2 = self.end_channels
        oc = self.output_channels
        flops_per_layer = (2 * 2 * (2 * dc) * rc * tc      # two tap dots
                           + 2 * (sc + rc) * dc * tc)      # skip+residual dot
        flops = n_layers * flops_per_layer
        flops += 2 * ec1 * sc * tc + 2 * ec2 * ec1 * tc + 2 * oc * ec2 * tc
        transcendentals = n_layers * 2 * dc * tc           # tanh + sigmoid
        bytes_accessed = int(sum(int(a.size) * a.dtype.itemsize for a in inputs)
                             + oc * tc * 4)
        return pl.CostEstimate(flops=int(flops),
                               transcendentals=int(transcendentals),
                               bytes_accessed=bytes_accessed)

    # ------------------------------ Pallas path ------------------------------

    def forward(self, inp):
        # inp: (1, 1, L) float32, NCL layout; N == 1 as in the fast-wavenet
        # usage (the batch dim is reused to encode dilation).
        n, c, _ = inp.shape
        assert n == 1 and c == 1
        x2d = inp[:, 0, -self.input_length:].astype(jnp.float32)   # (1, T0)
        t0 = x2d.shape[1]
        plan, t_final = self._plan(t0)
        out_len = self.output_length
        assert t_final >= out_len, "input shorter than receptive field + output"

        # lane-dense canvas: right-align the stream into a multiple of 128 lanes
        tc = max(_LANES, ((t0 + _LANES - 1) // _LANES) * _LANES)
        x_canvas = jnp.pad(x2d, ((0, 0), (tc - t0, 0)))

        kernel = _build_fused_kernel(plan, tc, self.dilation_channels,
                                     self.skip_channels, self.output_channels)
        inputs = [x_canvas, self.start_w, self.start_b,
                  self.wfg0, self.wfg1, self.bfg, self.wsr, self.bsr,
                  self.end_w1, self.end_b1, self.end_w2, self.end_b2,
                  self.end_w3, self.end_b3]

        # TODO(synk): for long sequences, tile the time axis with
        # receptive-field halos: a 'parallel' time grid to use both v7x
        # TensorCores, >=256-lane dot chunks for v6e, and tiles sized for the
        # 64 MiB v7x VMEM (vs 128 MiB on v5e/v6e) via vmem_limit_bytes.  At
        # these toy shapes one resident canvas is optimal and the binding unit
        # is the VPU/EUP (gating transcendentals), not the MXU.
        out_canvas = pl.pallas_call(
            kernel,
            out_shape=jax.ShapeDtypeStruct((self.output_channels, tc),
                                           jnp.float32),
            in_specs=[pl.BlockSpec(memory_space=pltpu.MemorySpace.VMEM)
                      for _ in inputs],
            out_specs=pl.BlockSpec(memory_space=pltpu.MemorySpace.VMEM),
            cost_estimate=self._cost_estimate(len(plan), tc, inputs),
        )(*inputs)
        # valid stream is right-aligned: trailing out_len lanes are the output.
        return out_canvas[None, :, tc - out_len:]        # (1, OC, output_length)

    # -------------------- pure-JAX reference (validation) --------------------

    def forward_reference(self, inp):
        """Flat-stream reference (no Pallas) with the same bf16-at-MXU precision
        policy as the kernel; used to validate the fixed-canvas refactor."""
        dc, sc = self.dilation_channels, self.skip_channels
        x2d = inp[:, 0, -self.input_length:].astype(jnp.float32)
        plan, _ = self._plan(x2d.shape[1])
        h = self.start_w * x2d + self.start_b
        skip = None
        for i, (d, pad, _t_in) in enumerate(plan):
            if pad:
                h = jnp.concatenate(
                    [jnp.zeros((h.shape[0], pad), h.dtype), h], axis=1)
            t = h.shape[1]
            h_bf = h.astype(jnp.bfloat16)
            fg = (jnp.dot(self.wfg0[i], h_bf[:, :t - d],
                          preferred_element_type=jnp.float32)
                  + jnp.dot(self.wfg1[i], h_bf[:, d:],
                            preferred_element_type=jnp.float32)
                  + self.bfg[i])
            act = jnp.tanh(fg[:dc]) * jax.nn.sigmoid(fg[dc:])
            sr = (jnp.dot(self.wsr[i], act.astype(jnp.bfloat16),
                          preferred_element_type=jnp.float32) + self.bsr[i])
            s = sr[:sc]
            skip = s if skip is None else s + skip[:, skip.shape[1] - s.shape[1]:]
            h = sr[sc:] + h[:, d:]
        y = jnp.maximum(skip[:, skip.shape[1] - self.output_length:], 0.0)
        y = (jnp.dot(self.end_w1, y.astype(jnp.bfloat16),
                     preferred_element_type=jnp.float32) + self.end_b1)
        y = jnp.maximum(y, 0.0)
        y = (jnp.dot(self.end_w2, y.astype(jnp.bfloat16),
                     preferred_element_type=jnp.float32) + self.end_b2)
        y = jnp.maximum(y, 0.0)
        if self.output_channels == 1:
            out = jnp.sum(self.end_w3 * y, axis=0, keepdims=True) + self.end_b3
        else:
            out = (jnp.dot(self.end_w3, y.astype(jnp.bfloat16),
                           preferred_element_type=jnp.float32) + self.end_b3)
        return out[None]


# ----------------------------------- main -------------------------------------

if __name__ == "__main__":
    key = jax.random.PRNGKey(0)
    pkey, xkey = jax.random.split(key)

    model = WaveNetModelPallas(SMALL_SETTINGS, pkey)
    # receptive_field = 15, output_length = 8  ->  needs >= 22 samples
    L_in = model.input_length + 10            # 32
    x = jax.random.normal(xkey, (1, 1, L_in), dtype=jnp.float32)

    out = jax.block_until_ready(model.forward(x))

    assert out.shape == (1, SMALL_SETTINGS['output_channels'],
                         SMALL_SETTINGS['output_length']), out.shape
    assert bool(jnp.all(jnp.isfinite(out)))

    # Validate the fixed-canvas fused kernel against the pure-JAX flat-stream
    # reference (same precision policy, so the tolerance only absorbs op-order
    # / transcendental-implementation noise).
    ref = jax.block_until_ready(model.forward_reference(x))
    assert bool(jnp.allclose(out, ref, atol=1e-2, rtol=1e-2)), \
        float(jnp.max(jnp.abs(out - ref)))

    print("KERNEL_OK")
</pallas_src>

<mosaic_0001>
module attributes {stable_mosaic.version = 11 : i64} {
  func.func @kernel(%arg0: memref<1x128xf32, #tpu.memory_space<vmem>>, %arg1: memref<8x1xf32, #tpu.memory_space<vmem>>, %arg2: memref<8x1xf32, #tpu.memory_space<vmem>>, %arg3: memref<6x16x8xbf16, #tpu.memory_space<vmem>>, %arg4: memref<6x16x8xbf16, #tpu.memory_space<vmem>>, %arg5: memref<6x16x1xf32, #tpu.memory_space<vmem>>, %arg6: memref<6x24x8xbf16, #tpu.memory_space<vmem>>, %arg7: memref<6x24x1xf32, #tpu.memory_space<vmem>>, %arg8: memref<16x16xbf16, #tpu.memory_space<vmem>>, %arg9: memref<16x1xf32, #tpu.memory_space<vmem>>, %arg10: memref<8x16xbf16, #tpu.memory_space<vmem>>, %arg11: memref<8x1xf32, #tpu.memory_space<vmem>>, %arg12: memref<8x1xf32, #tpu.memory_space<vmem>>, %arg13: memref<1x1xf32, #tpu.memory_space<vmem>>, %arg14: memref<1x128xf32, #tpu.memory_space<vmem>>) attributes {dimension_semantics = [], scalar_prefetch = 0 : i64, scratch_operands = 0 : i64, tpu.core_type = #tpu.core_type<tc>} {
    %c0 = arith.constant 0 : index
    %c0_0 = arith.constant 0 : index
    %0 = vector.load %arg1[%c0, %c0_0] : memref<8x1xf32, #tpu.memory_space<vmem>>, vector<8x1xf32>
    %c0_1 = arith.constant 0 : index
    %c0_2 = arith.constant 0 : index
    %1 = vector.load %arg0[%c0_1, %c0_2] : memref<1x128xf32, #tpu.memory_space<vmem>>, vector<1x128xf32>
    %2 = vector.broadcast %0 : vector<8x1xf32> to vector<8x128xf32>
    %3 = vector.broadcast %1 : vector<1x128xf32> to vector<8x128xf32>
    %4 = arith.mulf %2, %3 : vector<8x128xf32>
    %c0_3 = arith.constant 0 : index
    %c0_4 = arith.constant 0 : index
    %5 = vector.load %arg2[%c0_3, %c0_4] : memref<8x1xf32, #tpu.memory_space<vmem>>, vector<8x1xf32>
    %6 = vector.broadcast %5 : vector<8x1xf32> to vector<8x128xf32>
    %7 = arith.addf %4, %6 : vector<8x128xf32>
    %8 = tpu.iota {dimensions = array<i32: 1>} : vector<1x128xi32>
    %c1_i32 = arith.constant 1 : i32
    %9 = tpu.dynamic_rotate %7 by %c1_i32 dim 1 : vector<8x128xf32>, i32 -> vector<8x128xf32>
    %c0_5 = arith.constant 0 : index
    %c0_6 = arith.constant 0 : index
    %c0_7 = arith.constant 0 : index
    %10 = vector.load %arg3[%c0_5, %c0_6, %c0_7] : memref<6x16x8xbf16, #tpu.memory_space<vmem>>, vector<1x16x8xbf16>
    %11 = vector.shape_cast %10 : vector<1x16x8xbf16> to vector<16x8xbf16>
    %12 = arith.truncf %9 : vector<8x128xf32> to vector<8x128xbf16>
    %cst = arith.constant dense<0.000000e+00> : vector<16x128xf32>
    %13 = tpu.matmul %11, %12, %cst {dimension_numbers = #tpu.dot_dimension_numbers<[1], [0], [0], [1], [0, 0, 1, 1], [], []>} : vector<16x8xbf16>, vector<8x128xbf16>, vector<16x128xf32> -> vector<16x128xf32>
    %c0_8 = arith.constant 0 : index
    %c0_9 = arith.constant 0 : index
    %c0_10 = arith.constant 0 : index
    %14 = vector.load %arg4[%c0_8, %c0_9, %c0_10] : memref<6x16x8xbf16, #tpu.memory_space<vmem>>, vector<1x16x8xbf16>
    %15 = vector.shape_cast %14 : vector<1x16x8xbf16> to vector<16x8xbf16>
    %16 = arith.truncf %7 : vector<8x128xf32> to vector<8x128xbf16>
    %cst_11 = arith.constant dense<0.000000e+00> : vector<16x128xf32>
    %17 = tpu.matmul %15, %16, %cst_11 {dimension_numbers = #tpu.dot_dimension_numbers<[1], [0], [0], [1], [0, 0, 1, 1], [], []>} : vector<16x8xbf16>, vector<8x128xbf16>, vector<16x128xf32> -> vector<16x128xf32>
    %18 = arith.addf %13, %17 : vector<16x128xf32>
    %c0_12 = arith.constant 0 : index
    %c0_13 = arith.constant 0 : index
    %c0_14 = arith.constant 0 : index
    %19 = vector.load %arg5[%c0_12, %c0_13, %c0_14] : memref<6x16x1xf32, #tpu.memory_space<vmem>>, vector<1x16x1xf32>
    %20 = vector.shape_cast %19 : vector<1x16x1xf32> to vector<16x1xf32>
    %21 = vector.broadcast %20 : vector<16x1xf32> to vector<16x128xf32>
    %22 = arith.addf %18, %21 : vector<16x128xf32>
    %23 = vector.extract_strided_slice %22 {offsets = [0, 0], sizes = [8, 128], strides = [1, 1]} : vector<16x128xf32> to vector<8x128xf32>
    %24 = math.tanh %23 : vector<8x128xf32>
    %25 = vector.extract_strided_slice %22 {offsets = [8, 0], sizes = [8, 128], strides = [1, 1]} : vector<16x128xf32> to vector<8x128xf32>
    %26 = arith.negf %25 : vector<8x128xf32>
    %27 = math.exp %26 : vector<8x128xf32>
    %cst_15 = arith.constant 1.000000e+00 : f32
    %28 = vector.broadcast %cst_15 : f32 to vector<8x128xf32>
    %29 = arith.addf %28, %27 : vector<8x128xf32>
    %30 = arith.divf %28, %29 : vector<8x128xf32>
    %31 = arith.mulf %24, %30 : vector<8x128xf32>
    %c0_16 = arith.constant 0 : index
    %c0_17 = arith.constant 0 : index
    %c0_18 = arith.constant 0 : index
    %32 = vector.load %arg6[%c0_16, %c0_17, %c0_18] : memref<6x24x8xbf16, #tpu.memory_space<vmem>>, vector<1x24x8xbf16>
    %33 = vector.shape_cast %32 : vector<1x24x8xbf16> to vector<24x8xbf16>
    %34 = arith.truncf %31 : vector<8x128xf32> to vector<8x128xbf16>
    %cst_19 = arith.constant dense<0.000000e+00> : vector<24x128xf32>
    %35 = tpu.matmul %33, %34, %cst_19 {dimension_numbers = #tpu.dot_dimension_numbers<[1], [0], [0], [1], [0, 0, 1, 1], [], []>} : vector<24x8xbf16>, vector<8x128xbf16>, vector<24x128xf32> -> vector<24x128xf32>
    %c0_20 = arith.constant 0 : index
    %c0_21 = arith.constant 0 : index
    %c0_22 = arith.constant 0 : index
    %36 = vector.load %arg7[%c0_20, %c0_21, %c0_22] : memref<6x24x1xf32, #tpu.memory_space<vmem>>, vector<1x24x1xf32>
    %37 = vector.shape_cast %36 : vector<1x24x1xf32> to vector<24x1xf32>
    %38 = vector.broadcast %37 : vector<24x1xf32> to vector<24x128xf32>
    %39 = arith.addf %35, %38 : vector<24x128xf32>
    %40 = vector.extract_strided_slice %39 {offsets = [0, 0], sizes = [16, 128], strides = [1, 1]} : vector<24x128xf32> to vector<16x128xf32>
    %41 = vector.extract_strided_slice %39 {offsets = [16, 0], sizes = [8, 128], strides = [1, 1]} : vector<24x128xf32> to vector<8x128xf32>
    %42 = arith.addf %41, %7 : vector<8x128xf32>
    %c107_i32 = arith.constant 107 : i32
    %43 = vector.broadcast %c107_i32 : i32 to vector<1x128xi32>
    %44 = arith.cmpi sge, %8, %43 : vector<1x128xi32>
    %cst_23 = arith.constant 0.000000e+00 : f32
    %45 = vector.shape_cast %44 : vector<1x128xi1> to vector<1x128xi1>
    %46 = vector.broadcast %45 : vector<1x128xi1> to vector<8x128xi1>
    %47 = vector.broadcast %cst_23 : f32 to vector<8x128xf32>
    %48 = arith.select %46, %42, %47 : vector<8x128xi1>, vector<8x128xf32>
    %c2_i32 = arith.constant 2 : i32
    %49 = tpu.dynamic_rotate %48 by %c2_i32 dim 1 : vector<8x128xf32>, i32 -> vector<8x128xf32>
    %c1 = arith.constant 1 : index
    %c0_24 = arith.constant 0 : index
    %c0_25 = arith.constant 0 : index
    %50 = vector.load %arg3[%c1, %c0_24, %c0_25] : memref<6x16x8xbf16, #tpu.memory_space<vmem>>, vector<1x16x8xbf16>
    %51 = vector.shape_cast %50 : vector<1x16x8xbf16> to vector<16x8xbf16>
    %52 = arith.truncf %49 : vector<8x128xf32> to vector<8x128xbf16>
    %cst_26 = arith.constant dense<0.000000e+00> : vector<16x128xf32>
    %53 = tpu.matmul %51, %52, %cst_26 {dimension_numbers = #tpu.dot_dimension_numbers<[1], [0], [0], [1], [0, 0, 1, 1], [], []>} : vector<16x8xbf16>, vector<8x128xbf16>, vector<16x128xf32> -> vector<16x128xf32>
    %c1_27 = arith.constant 1 : index
    %c0_28 = arith.constant 0 : index
    %c0_29 = arith.constant 0 : index
    %54 = vector.load %arg4[%c1_27, %c0_28, %c0_29] : memref<6x16x8xbf16, #tpu.memory_space<vmem>>, vector<1x16x8xbf16>
    %55 = vector.shape_cast %54 : vector<1x16x8xbf16> to vector<16x8xbf16>
    %56 = arith.truncf %48 : vector<8x128xf32> to vector<8x128xbf16>
    %cst_30 = arith.constant dense<0.000000e+00> : vector<16x128xf32>
    %57 = tpu.matmul %55, %56, %cst_30 {dimension_numbers = #tpu.dot_dimension_numbers<[1], [0], [0], [1], [0, 0, 1, 1], [], []>} : vector<16x8xbf16>, vector<8x128xbf16>, vector<16x128xf32> -> vector<16x128xf32>
    %58 = arith.addf %53, %57 : vector<16x128xf32>
    %c1_31 = arith.constant 1 : index
    %c0_32 = arith.constant 0 : index
    %c0_33 = arith.constant 0 : index
    %59 = vector.load %arg5[%c1_31, %c0_32, %c0_33] : memref<6x16x1xf32, #tpu.memory_space<vmem>>, vector<1x16x1xf32>
    %60 = vector.shape_cast %59 : vector<1x16x1xf32> to vector<16x1xf32>
    %61 = vector.broadcast %60 : vector<16x1xf32> to vector<16x128xf32>
    %62 = arith.addf %58, %61 : vector<16x128xf32>
    %63 = vector.extract_strided_slice %62 {offsets = [0, 0], sizes = [8, 128], strides = [1, 1]} : vector<16x128xf32> to vector<8x128xf32>
    %64 = math.tanh %63 : vector<8x128xf32>
    %65 = vector.extract_strided_slice %62 {offsets = [8, 0], sizes = [8, 128], strides = [1, 1]} : vector<16x128xf32> to vector<8x128xf32>
    %66 = arith.negf %65 : vector<8x128xf32>
    %67 = math.exp %66 : vector<8x128xf32>
    %cst_34 = arith.constant 1.000000e+00 : f32
    %68 = vector.broadcast %cst_34 : f32 to vector<8x128xf32>
    %69 = arith.addf %68, %67 : vector<8x128xf32>
    %70 = arith.divf %68, %69 : vector<8x128xf32>
    %71 = arith.mulf %64, %70 : vector<8x128xf32>
    %c1_35 = arith.constant 1 : index
    %c0_36 = arith.constant 0 : index
    %c0_37 = arith.constant 0 : index
    %72 = vector.load %arg6[%c1_35, %c0_36, %c0_37] : memref<6x24x8xbf16, #tpu.memory_space<vmem>>, vector<1x24x8xbf16>
    %73 = vector.shape_cast %72 : vector<1x24x8xbf16> to vector<24x8xbf16>
    %74 = arith.truncf %71 : vector<8x128xf32> to vector<8x128xbf16>
    %cst_38 = arith.constant dense<0.000000e+00> : vector<24x128xf32>
    %75 = tpu.matmul %73, %74, %cst_38 {dimension_numbers = #tpu.dot_dimension_numbers<[1], [0], [0], [1], [0, 0, 1, 1], [], []>} : vector<24x8xbf16>, vector<8x128xbf16>, vector<24x128xf32> -> vector<24x128xf32>
    %c1_39 = arith.constant 1 : index
    %c0_40 = arith.constant 0 : index
    %c0_41 = arith.constant 0 : index
    %76 = vector.load %arg7[%c1_39, %c0_40, %c0_41] : memref<6x24x1xf32, #tpu.memory_space<vmem>>, vector<1x24x1xf32>
    %77 = vector.shape_cast %76 : vector<1x24x1xf32> to vector<24x1xf32>
    %78 = vector.broadcast %77 : vector<24x1xf32> to vector<24x128xf32>
    %79 = arith.addf %75, %78 : vector<24x128xf32>
    %80 = vector.extract_strided_slice %79 {offsets = [0, 0], sizes = [16, 128], strides = [1, 1]} : vector<24x128xf32> to vector<16x128xf32>
    %81 = arith.addf %40, %80 : vector<16x128xf32>
    %82 = vector.extract_strided_slice %79 {offsets = [16, 0], sizes = [8, 128], strides = [1, 1]} : vector<24x128xf32> to vector<8x128xf32>
    %83 = arith.addf %82, %48 : vector<8x128xf32>
    %c4_i32 = arith.constant 4 : i32
    %84 = tpu.dynamic_rotate %83 by %c4_i32 dim 1 : vector<8x128xf32>, i32 -> vector<8x128xf32>
    %c2 = arith.constant 2 : index
    %c0_42 = arith.constant 0 : index
    %c0_43 = arith.constant 0 : index
    %85 = vector.load %arg3[%c2, %c0_42, %c0_43] : memref<6x16x8xbf16, #tpu.memory_space<vmem>>, vector<1x16x8xbf16>
    %86 = vector.shape_cast %85 : vector<1x16x8xbf16> to vector<16x8xbf16>
    %87 = arith.truncf %84 : vector<8x128xf32> to vector<8x128xbf16>
    %cst_44 = arith.constant dense<0.000000e+00> : vector<16x128xf32>
    %88 = tpu.matmul %86, %87, %cst_44 {dimension_numbers = #tpu.dot_dimension_numbers<[1], [0], [0], [1], [0, 0, 1, 1], [], []>} : vector<16x8xbf16>, vector<8x128xbf16>, vector<16x128xf32> -> vector<16x128xf32>
    %c2_45 = arith.constant 2 : index
    %c0_46 = arith.constant 0 : index
    %c0_47 = arith.constant 0 : index
    %89 = vector.load %arg4[%c2_45, %c0_46, %c0_47] : memref<6x16x8xbf16, #tpu.memory_space<vmem>>, vector<1x16x8xbf16>
    %90 = vector.shape_cast %89 : vector<1x16x8xbf16> to vector<16x8xbf16>
    %91 = arith.truncf %83 : vector<8x128xf32> to vector<8x128xbf16>
    %cst_48 = arith.constant dense<0.000000e+00> : vector<16x128xf32>
    %92 = tpu.matmul %90, %91, %cst_48 {dimension_numbers = #tpu.dot_dimension_numbers<[1], [0], [0], [1], [0, 0, 1, 1], [], []>} : vector<16x8xbf16>, vector<8x128xbf16>, vector<16x128xf32> -> vector<16x128xf32>
    %93 = arith.addf %88, %92 : vector<16x128xf32>
    %c2_49 = arith.constant 2 : index
    %c0_50 = arith.constant 0 : index
    %c0_51 = arith.constant 0 : index
    %94 = vector.load %arg5[%c2_49, %c0_50, %c0_51] : memref<6x16x1xf32, #tpu.memory_space<vmem>>, vector<1x16x1xf32>
    %95 = vector.shape_cast %94 : vector<1x16x1xf32> to vector<16x1xf32>
    %96 = vector.broadcast %95 : vector<16x1xf32> to vector<16x128xf32>
    %97 = arith.addf %93, %96 : vector<16x128xf32>
    %98 = vector.extract_strided_slice %97 {offsets = [0, 0], sizes = [8, 128], strides = [1, 1]} : vector<16x128xf32> to vector<8x128xf32>
    %99 = math.tanh %98 : vector<8x128xf32>
    %100 = vector.extract_strided_slice %97 {offsets = [8, 0], sizes = [8, 128], strides = [1, 1]} : vector<16x128xf32> to vector<8x128xf32>
    %101 = arith.negf %100 : vector<8x128xf32>
    %102 = math.exp %101 : vector<8x128xf32>
    %cst_52 = arith.constant 1.000000e+00 : f32
    %103 = vector.broadcast %cst_52 : f32 to vector<8x128xf32>
    %104 = arith.addf %103, %102 : vector<8x128xf32>
    %105 = arith.divf %103, %104 : vector<8x128xf32>
    %106 = arith.mulf %99, %105 : vector<8x128xf32>
    %c2_53 = arith.constant 2 : index
    %c0_54 = arith.constant 0 : index
    %c0_55 = arith.constant 0 : index
    %107 = vector.load %arg6[%c2_53, %c0_54, %c0_55] : memref<6x24x8xbf16, #tpu.memory_space<vmem>>, vector<1x24x8xbf16>
    %108 = vector.shape_cast %107 : vector<1x24x8xbf16> to vector<24x8xbf16>
    %109 = arith.truncf %106 : vector<8x128xf32> to vector<8x128xbf16>
    %cst_56 = arith.constant dense<0.000000e+00> : vector<24x128xf32>
    %110 = tpu.matmul %108, %109, %cst_56 {dimension_numbers = #tpu.dot_dimension_numbers<[1], [0], [0], [1], [0, 0, 1, 1], [], []>} : vector<24x8xbf16>, vector<8x128xbf16>, vector<24x128xf32> -> vector<24x128xf32>
    %c2_57 = arith.constant 2 : index
    %c0_58 = arith.constant 0 : index
    %c0_59 = arith.constant 0 : index
    %111 = vector.load %arg7[%c2_57, %c0_58, %c0_59] : memref<6x24x1xf32, #tpu.memory_space<vmem>>, vector<1x24x1xf32>
    %112 = vector.shape_cast %111 : vector<1x24x1xf32> to vector<24x1xf32>
    %113 = vector.broadcast %112 : vector<24x1xf32> to vector<24x128xf32>
    %114 = arith.addf %110, %113 : vector<24x128xf32>
    %115 = vector.extract_strided_slice %114 {offsets = [0, 0], sizes = [16, 128], strides = [1, 1]} : vector<24x128xf32> to vector<16x128xf32>
    %116 = arith.addf %81, %115 : vector<16x128xf32>
    %117 = vector.extract_strided_slice %114 {offsets = [16, 0], sizes = [8, 128], strides = [1, 1]} : vector<24x128xf32> to vector<8x128xf32>
    %118 = arith.addf %117, %83 : vector<8x128xf32>
    %c1_i32_60 = arith.constant 1 : i32
    %119 = tpu.dynamic_rotate %118 by %c1_i32_60 dim 1 : vector<8x128xf32>, i32 -> vector<8x128xf32>
    %c3 = arith.constant 3 : index
    %c0_61 = arith.constant 0 : index
    %c0_62 = arith.constant 0 : index
    %120 = vector.load %arg3[%c3, %c0_61, %c0_62] : memref<6x16x8xbf16, #tpu.memory_space<vmem>>, vector<1x16x8xbf16>
    %121 = vector.shape_cast %120 : vector<1x16x8xbf16> to vector<16x8xbf16>
    %122 = arith.truncf %119 : vector<8x128xf32> to vector<8x128xbf16>
    %cst_63 = arith.constant dense<0.000000e+00> : vector<16x128xf32>
    %123 = tpu.matmul %121, %122, %cst_63 {dimension_numbers = #tpu.dot_dimension_numbers<[1], [0], [0], [1], [0, 0, 1, 1], [], []>} : vector<16x8xbf16>, vector<8x128xbf16>, vector<16x128xf32> -> vector<16x128xf32>
    %c3_64 = arith.constant 3 : index
    %c0_65 = arith.constant 0 : index
    %c0_66 = arith.constant 0 : index
    %124 = vector.load %arg4[%c3_64, %c0_65, %c0_66] : memref<6x16x8xbf16, #tpu.memory_space<vmem>>, vector<1x16x8xbf16>
    %125 = vector.shape_cast %124 : vector<1x16x8xbf16> to vector<16x8xbf16>
    %126 = arith.truncf %118 : vector<8x128xf32> to vector<8x128xbf16>
    %cst_67 = arith.constant dense<0.000000e+00> : vector<16x128xf32>
    %127 = tpu.matmul %125, %126, %cst_67 {dimension_numbers = #tpu.dot_dimension_numbers<[1], [0], [0], [1], [0, 0, 1, 1], [], []>} : vector<16x8xbf16>, vector<8x128xbf16>, vector<16x128xf32> -> vector<16x128xf32>
    %128 = arith.addf %123, %127 : vector<16x128xf32>
    %c3_68 = arith.constant 3 : index
    %c0_69 = arith.constant 0 : index
    %c0_70 = arith.constant 0 : index
    %129 = vector.load %arg5[%c3_68, %c0_69, %c0_70] : memref<6x16x1xf32, #tpu.memory_space<vmem>>, vector<1x16x1xf32>
    %130 = vector.shape_cast %129 : vector<1x16x1xf32> to vector<16x1xf32>
    %131 = vector.broadcast %130 : vector<16x1xf32> to vector<16x128xf32>
    %132 = arith.addf %128, %131 : vector<16x128xf32>
    %133 = vector.extract_strided_slice %132 {offsets = [0, 0], sizes = [8, 128], strides = [1, 1]} : vector<16x128xf32> to vector<8x128xf32>
    %134 = math.tanh %133 : vector<8x128xf32>
    %135 = vector.extract_strided_slice %132 {offsets = [8, 0], sizes = [8, 128], strides = [1, 1]} : vector<16x128xf32> to vector<8x128xf32>
    %136 = arith.negf %135 : vector<8x128xf32>
    %137 = math.exp %136 : vector<8x128xf32>
    %cst_71 = arith.constant 1.000000e+00 : f32
    %138 = vector.broadcast %cst_71 : f32 to vector<8x128xf32>
    %139 = arith.addf %138, %137 : vector<8x128xf32>
    %140 = arith.divf %138, %139 : vector<8x128xf32>
    %141 = arith.mulf %134, %140 : vector<8x128xf32>
    %c3_72 = arith.constant 3 : index
    %c0_73 = arith.constant 0 : index
    %c0_74 = arith.constant 0 : index
    %142 = vector.load %arg6[%c3_72, %c0_73, %c0_74] : memref<6x24x8xbf16, #tpu.memory_space<vmem>>, vector<1x24x8xbf16>
    %143 = vector.shape_cast %142 : vector<1x24x8xbf16> to vector<24x8xbf16>
    %144 = arith.truncf %141 : vector<8x128xf32> to vector<8x128xbf16>
    %cst_75 = arith.constant dense<0.000000e+00> : vector<24x128xf32>
    %145 = tpu.matmul %143, %144, %cst_75 {dimension_numbers = #tpu.dot_dimension_numbers<[1], [0], [0], [1], [0, 0, 1, 1], [], []>} : vector<24x8xbf16>, vector<8x128xbf16>, vector<24x128xf32> -> vector<24x128xf32>
    %c3_76 = arith.constant 3 : index
    %c0_77 = arith.constant 0 : index
    %c0_78 = arith.constant 0 : index
    %146 = vector.load %arg7[%c3_76, %c0_77, %c0_78] : memref<6x24x1xf32, #tpu.memory_space<vmem>>, vector<1x24x1xf32>
    %147 = vector.shape_cast %146 : vector<1x24x1xf32> to vector<24x1xf32>
    %148 = vector.broadcast %147 : vector<24x1xf32> to vector<24x128xf32>
    %149 = arith.addf %145, %148 : vector<24x128xf32>
    %150 = vector.extract_strided_slice %149 {offsets = [0, 0], sizes = [16, 128], strides = [1, 1]} : vector<24x128xf32> to vector<16x128xf32>
    %151 = arith.addf %116, %150 : vector<16x128xf32>
    %152 = vector.extract_strided_slice %149 {offsets = [16, 0], sizes = [8, 128], strides = [1, 1]} : vector<24x128xf32> to vector<8x128xf32>
    %153 = arith.addf %152, %118 : vector<8x128xf32>
    %c113_i32 = arith.constant 113 : i32
    %154 = vector.broadcast %c113_i32 : i32 to vector<1x128xi32>
    %155 = arith.cmpi sge, %8, %154 : vector<1x128xi32>
    %cst_79 = arith.constant 0.000000e+00 : f32
    %156 = vector.shape_cast %155 : vector<1x128xi1> to vector<1x128xi1>
    %157 = vector.broadcast %156 : vector<1x128xi1> to vector<8x128xi1>
    %158 = vector.broadcast %cst_79 : f32 to vector<8x128xf32>
    %159 = arith.select %157, %153, %158 : vector<8x128xi1>, vector<8x128xf32>
    %c2_i32_80 = arith.constant 2 : i32
    %160 = tpu.dynamic_rotate %159 by %c2_i32_80 dim 1 : vector<8x128xf32>, i32 -> vector<8x128xf32>
    %c4 = arith.constant 4 : index
    %c0_81 = arith.constant 0 : index
    %c0_82 = arith.constant 0 : index
    %161 = vector.load %arg3[%c4, %c0_81, %c0_82] : memref<6x16x8xbf16, #tpu.memory_space<vmem>>, vector<1x16x8xbf16>
    %162 = vector.shape_cast %161 : vector<1x16x8xbf16> to vector<16x8xbf16>
    %163 = arith.truncf %160 : vector<8x128xf32> to vector<8x128xbf16>
    %cst_83 = arith.constant dense<0.000000e+00> : vector<16x128xf32>
    %164 = tpu.matmul %162, %163, %cst_83 {dimension_numbers = #tpu.dot_dimension_numbers<[1], [0], [0], [1], [0, 0, 1, 1], [], []>} : vector<16x8xbf16>, vector<8x128xbf16>, vector<16x128xf32> -> vector<16x128xf32>
    %c4_84 = arith.constant 4 : index
    %c0_85 = arith.constant 0 : index
    %c0_86 = arith.constant 0 : index
    %165 = vector.load %arg4[%c4_84, %c0_85, %c0_86] : memref<6x16x8xbf16, #tpu.memory_space<vmem>>, vector<1x16x8xbf16>
    %166 = vector.shape_cast %165 : vector<1x16x8xbf16> to vector<16x8xbf16>
    %167 = arith.truncf %159 : vector<8x128xf32> to vector<8x128xbf16>
    %cst_87 = arith.constant dense<0.000000e+00> : vector<16x128xf32>
    %168 = tpu.matmul %166, %167, %cst_87 {dimension_numbers = #tpu.dot_dimension_numbers<[1], [0], [0], [1], [0, 0, 1, 1], [], []>} : vector<16x8xbf16>, vector<8x128xbf16>, vector<16x128xf32> -> vector<16x128xf32>
    %169 = arith.addf %164, %168 : vector<16x128xf32>
    %c4_88 = arith.constant 4 : index
    %c0_89 = arith.constant 0 : index
    %c0_90 = arith.constant 0 : index
    %170 = vector.load %arg5[%c4_88, %c0_89, %c0_90] : memref<6x16x1xf32, #tpu.memory_space<vmem>>, vector<1x16x1xf32>
    %171 = vector.shape_cast %170 : vector<1x16x1xf32> to vector<16x1xf32>
    %172 = vector.broadcast %171 : vector<16x1xf32> to vector<16x128xf32>
    %173 = arith.addf %169, %172 : vector<16x128xf32>
    %174 = vector.extract_strided_slice %173 {offsets = [0, 0], sizes = [8, 128], strides = [1, 1]} : vector<16x128xf32> to vector<8x128xf32>
    %175 = math.tanh %174 : vector<8x128xf32>
    %176 = vector.extract_strided_slice %173 {offsets = [8, 0], sizes = [8, 128], strides = [1, 1]} : vector<16x128xf32> to vector<8x128xf32>
    %177 = arith.negf %176 : vector<8x128xf32>
    %178 = math.exp %177 : vector<8x128xf32>
    %cst_91 = arith.constant 1.000000e+00 : f32
    %179 = vector.broadcast %cst_91 : f32 to vector<8x128xf32>
    %180 = arith.addf %179, %178 : vector<8x128xf32>
    %181 = arith.divf %179, %180 : vector<8x128xf32>
    %182 = arith.mulf %175, %181 : vector<8x128xf32>
    %c4_92 = arith.constant 4 : index
    %c0_93 = arith.constant 0 : index
    %c0_94 = arith.constant 0 : index
    %183 = vector.load %arg6[%c4_92, %c0_93, %c0_94] : memref<6x24x8xbf16, #tpu.memory_space<vmem>>, vector<1x24x8xbf16>
    %184 = vector.shape_cast %183 : vector<1x24x8xbf16> to vector<24x8xbf16>
    %185 = arith.truncf %182 : vector<8x128xf32> to vector<8x128xbf16>
    %cst_95 = arith.constant dense<0.000000e+00> : vector<24x128xf32>
    %186 = tpu.matmul %184, %185, %cst_95 {dimension_numbers = #tpu.dot_dimension_numbers<[1], [0], [0], [1], [0, 0, 1, 1], [], []>} : vector<24x8xbf16>, vector<8x128xbf16>, vector<24x128xf32> -> vector<24x128xf32>
    %c4_96 = arith.constant 4 : index
    %c0_97 = arith.constant 0 : index
    %c0_98 = arith.constant 0 : index
    %187 = vector.load %arg7[%c4_96, %c0_97, %c0_98] : memref<6x24x1xf32, #tpu.memory_space<vmem>>, vector<1x24x1xf32>
    %188 = vector.shape_cast %187 : vector<1x24x1xf32> to vector<24x1xf32>
    %189 = vector.broadcast %188 : vector<24x1xf32> to vector<24x128xf32>
    %190 = arith.addf %186, %189 : vector<24x128xf32>
    %191 = vector.extract_strided_slice %190 {offsets = [0, 0], sizes = [16, 128], strides = [1, 1]} : vector<24x128xf32> to vector<16x128xf32>
    %192 = arith.addf %151, %191 : vector<16x128xf32>
    %193 = vector.extract_strided_slice %190 {offsets = [16, 0], sizes = [8, 128], strides = [1, 1]} : vector<24x128xf32> to vector<8x128xf32>
    %194 = arith.addf %193, %159 : vector<8x128xf32>
    %c114_i32 = arith.constant 114 : i32
    %195 = vector.broadcast %c114_i32 : i32 to vector<1x128xi32>
    %196 = arith.cmpi sge, %8, %195 : vector<1x128xi32>
    %cst_99 = arith.constant 0.000000e+00 : f32
    %197 = vector.shape_cast %196 : vector<1x128xi1> to vector<1x128xi1>
    %198 = vector.broadcast %197 : vector<1x128xi1> to vector<8x128xi1>
    %199 = vector.broadcast %cst_99 : f32 to vector<8x128xf32>
    %200 = arith.select %198, %194, %199 : vector<8x128xi1>, vector<8x128xf32>
    %c4_i32_100 = arith.constant 4 : i32
    %201 = tpu.dynamic_rotate %200 by %c4_i32_100 dim 1 : vector<8x128xf32>, i32 -> vector<8x128xf32>
    %c5 = arith.constant 5 : index
    %c0_101 = arith.constant 0 : index
    %c0_102 = arith.constant 0 : index
    %202 = vector.load %arg3[%c5, %c0_101, %c0_102] : memref<6x16x8xbf16, #tpu.memory_space<vmem>>, vector<1x16x8xbf16>
    %203 = vector.shape_cast %202 : vector<1x16x8xbf16> to vector<16x8xbf16>
    %204 = arith.truncf %201 : vector<8x128xf32> to vector<8x128xbf16>
    %cst_103 = arith.constant dense<0.000000e+00> : vector<16x128xf32>
    %205 = tpu.matmul %203, %204, %cst_103 {dimension_numbers = #tpu.dot_dimension_numbers<[1], [0], [0], [1], [0, 0, 1, 1], [], []>} : vector<16x8xbf16>, vector<8x128xbf16>, vector<16x128xf32> -> vector<16x128xf32>
    %c5_104 = arith.constant 5 : index
    %c0_105 = arith.constant 0 : index
    %c0_106 = arith.constant 0 : index
    %206 = vector.load %arg4[%c5_104, %c0_105, %c0_106] : memref<6x16x8xbf16, #tpu.memory_space<vmem>>, vector<1x16x8xbf16>
    %207 = vector.shape_cast %206 : vector<1x16x8xbf16> to vector<16x8xbf16>
    %208 = arith.truncf %200 : vector<8x128xf32> to vector<8x128xbf16>
    %cst_107 = arith.constant dense<0.000000e+00> : vector<16x128xf32>
    %209 = tpu.matmul %207, %208, %cst_107 {dimension_numbers = #tpu.dot_dimension_numbers<[1], [0], [0], [1], [0, 0, 1, 1], [], []>} : vector<16x8xbf16>, vector<8x128xbf16>, vector<16x128xf32> -> vector<16x128xf32>
    %210 = arith.addf %205, %209 : vector<16x128xf32>
    %c5_108 = arith.constant 5 : index
    %c0_109 = arith.constant 0 : index
    %c0_110 = arith.constant 0 : index
    %211 = vector.load %arg5[%c5_108, %c0_109, %c0_110] : memref<6x16x1xf32, #tpu.memory_space<vmem>>, vector<1x16x1xf32>
    %212 = vector.shape_cast %211 : vector<1x16x1xf32> to vector<16x1xf32>
    %213 = vector.broadcast %212 : vector<16x1xf32> to vector<16x128xf32>
    %214 = arith.addf %210, %213 : vector<16x128xf32>
    %215 = vector.extract_strided_slice %214 {offsets = [0, 0], sizes = [8, 128], strides = [1, 1]} : vector<16x128xf32> to vector<8x128xf32>
    %216 = math.tanh %215 : vector<8x128xf32>
    %217 = vector.extract_strided_slice %214 {offsets = [8, 0], sizes = [8, 128], strides = [1, 1]} : vector<16x128xf32> to vector<8x128xf32>
    %218 = arith.negf %217 : vector<8x128xf32>
    %219 = math.exp %218 : vector<8x128xf32>
    %cst_111 = arith.constant 1.000000e+00 : f32
    %220 = vector.broadcast %cst_111 : f32 to vector<8x128xf32>
    %221 = arith.addf %220, %219 : vector<8x128xf32>
    %222 = arith.divf %220, %221 : vector<8x128xf32>
    %223 = arith.mulf %216, %222 : vector<8x128xf32>
    %c5_112 = arith.constant 5 : index
    %c0_113 = arith.constant 0 : index
    %c0_114 = arith.constant 0 : index
    %224 = vector.load %arg6[%c5_112, %c0_113, %c0_114] : memref<6x24x8xbf16, #tpu.memory_space<vmem>>, vector<1x24x8xbf16>
    %225 = vector.shape_cast %224 : vector<1x24x8xbf16> to vector<24x8xbf16>
    %226 = arith.truncf %223 : vector<8x128xf32> to vector<8x128xbf16>
    %cst_115 = arith.constant dense<0.000000e+00> : vector<24x128xf32>
    %227 = tpu.matmul %225, %226, %cst_115 {dimension_numbers = #tpu.dot_dimension_numbers<[1], [0], [0], [1], [0, 0, 1, 1], [], []>} : vector<24x8xbf16>, vector<8x128xbf16>, vector<24x128xf32> -> vector<24x128xf32>
    %c5_116 = arith.constant 5 : index
    %c0_117 = arith.constant 0 : index
    %c0_118 = arith.constant 0 : index
    %228 = vector.load %arg7[%c5_116, %c0_117, %c0_118] : memref<6x24x1xf32, #tpu.memory_space<vmem>>, vector<1x24x1xf32>
    %229 = vector.shape_cast %228 : vector<1x24x1xf32> to vector<24x1xf32>
    %230 = vector.broadcast %229 : vector<24x1xf32> to vector<24x128xf32>
    %231 = arith.addf %227, %230 : vector<24x128xf32>
    %232 = vector.extract_strided_slice %231 {offsets = [0, 0], sizes = [16, 128], strides = [1, 1]} : vector<24x128xf32> to vector<16x128xf32>
    %233 = arith.addf %192, %232 : vector<16x128xf32>
    %cst_119 = arith.constant 0.000000e+00 : f32
    %234 = vector.broadcast %cst_119 : f32 to vector<16x128xf32>
    %235 = arith.maximumf %233, %234 : vector<16x128xf32>
    %c0_120 = arith.constant 0 : index
    %c0_121 = arith.constant 0 : index
    %236 = vector.load %arg8[%c0_120, %c0_121] : memref<16x16xbf16, #tpu.memory_space<vmem>>, vector<16x16xbf16>
    %237 = arith.truncf %235 : vector<16x128xf32> to vector<16x128xbf16>
    %cst_122 = arith.constant dense<0.000000e+00> : vector<16x128xf32>
    %238 = tpu.matmul %236, %237, %cst_122 {dimension_numbers = #tpu.dot_dimension_numbers<[1], [0], [0], [1], [0, 0, 1, 1], [], []>} : vector<16x16xbf16>, vector<16x128xbf16>, vector<16x128xf32> -> vector<16x128xf32>
    %c0_123 = arith.constant 0 : index
    %c0_124 = arith.constant 0 : index
    %239 = vector.load %arg9[%c0_123, %c0_124] : memref<16x1xf32, #tpu.memory_space<vmem>>, vector<16x1xf32>
    %240 = vector.broadcast %239 : vector<16x1xf32> to vector<16x128xf32>
    %241 = arith.addf %238, %240 : vector<16x128xf32>
    %cst_125 = arith.constant 0.000000e+00 : f32
    %242 = vector.broadcast %cst_125 : f32 to vector<16x128xf32>
    %243 = arith.maximumf %241, %242 : vector<16x128xf32>
    %c0_126 = arith.constant 0 : index
    %c0_127 = arith.constant 0 : index
    %244 = vector.load %arg10[%c0_126, %c0_127] : memref<8x16xbf16, #tpu.memory_space<vmem>>, vector<8x16xbf16>
    %245 = arith.truncf %243 : vector<16x128xf32> to vector<16x128xbf16>
    %cst_128 = arith.constant dense<0.000000e+00> : vector<8x128xf32>
    %246 = tpu.matmul %244, %245, %cst_128 {dimension_numbers = #tpu.dot_dimension_numbers<[1], [0], [0], [1], [0, 0, 1, 1], [], []>} : vector<8x16xbf16>, vector<16x128xbf16>, vector<8x128xf32> -> vector<8x128xf32>
    %c0_129 = arith.constant 0 : index
    %c0_130 = arith.constant 0 : index
    %247 = vector.load %arg11[%c0_129, %c0_130] : memref<8x1xf32, #tpu.memory_space<vmem>>, vector<8x1xf32>
    %248 = vector.broadcast %247 : vector<8x1xf32> to vector<8x128xf32>
    %249 = arith.addf %246, %248 : vector<8x128xf32>
    %cst_131 = arith.constant 0.000000e+00 : f32
    %250 = vector.broadcast %cst_131 : f32 to vector<8x128xf32>
    %251 = arith.maximumf %249, %250 : vector<8x128xf32>
    %c0_132 = arith.constant 0 : index
    %c0_133 = arith.constant 0 : index
    %252 = vector.load %arg12[%c0_132, %c0_133] : memref<8x1xf32, #tpu.memory_space<vmem>>, vector<8x1xf32>
    %253 = vector.broadcast %252 : vector<8x1xf32> to vector<8x128xf32>
    %254 = arith.mulf %253, %251 : vector<8x128xf32>
    %cst_134 = arith.constant dense<0.000000e+00> : vector<128xf32>
    %255 = vector.multi_reduction <add>, %254, %cst_134 [0] : vector<8x128xf32> to vector<128xf32>
    %256 = vector.shape_cast %255 : vector<128xf32> to vector<1x128xf32>
    %c0_135 = arith.constant 0 : index
    %c0_136 = arith.constant 0 : index
    %257 = vector.load %arg13[%c0_135, %c0_136] : memref<1x1xf32, #tpu.memory_space<vmem>>, vector<1x1xf32>
    %258 = vector.broadcast %257 : vector<1x1xf32> to vector<1x128xf32>
    %259 = arith.addf %256, %258 : vector<1x128xf32>
    %c0_137 = arith.constant 0 : index
    %c0_138 = arith.constant 0 : index
    %260 = vector.load %arg14[%c0_137, %c0_138] : memref<1x128xf32, #tpu.memory_space<vmem>>, vector<1x128xf32>
    tpu.vector_store %arg14[%c0_137, %c0_138], %259 {strides = array<i32>} : memref<1x128xf32, #tpu.memory_space<vmem>>, vector<1x128xf32>,
    return
  }
}

</mosaic_0001>

<llo_original>
// kernel: tpu_custom_call.1
$region0: #{tpu_custom_call.1}
  #allocation0 [shape = 'u32[]', space=smem, size = 0x4, offset = 0x4, fixed_abs, tag = 'smem constant byte address 0x4 - core index']
  #allocation1 [shape = 'u32[144,128]{1,0:T(1,128)}', space=vmem, size = 0x12000, scoped, tag = 'internal scratch']
  #allocation2 [shape = 'f32[1,1]{1,0:T(1,128)S(1)}', space=vmem, size = 0x200, scoped, tag = 'scoped memory for tpu_custom_call.1']
  %s0 = inlined_call_operand.vmem [shape: f32[1,128], index: 0, kind: input, shape index: {}]
  %s1 = inlined_call_operand.vmem [shape: f32[8,1], index: 1, kind: input, shape index: {}]
  %s2 = inlined_call_operand.vmem [shape: f32[8,1], index: 2, kind: input, shape index: {}]
  %s3 = inlined_call_operand.vmem [shape: bf16[6,16,8], index: 3, kind: input, shape index: {}]
  %s4 = inlined_call_operand.vmem [shape: bf16[6,16,8], index: 4, kind: input, shape index: {}]
  %s5 = inlined_call_operand.vmem [shape: f32[6,16,1], index: 5, kind: input, shape index: {}]
  %s6 = inlined_call_operand.vmem [shape: bf16[6,24,8], index: 6, kind: input, shape index: {}]
  %s7 = inlined_call_operand.vmem [shape: f32[6,24,1], index: 7, kind: input, shape index: {}]
  %s8 = inlined_call_operand.vmem [shape: bf16[16,16], index: 8, kind: input, shape index: {}]
  %s9 = inlined_call_operand.vmem [shape: f32[16,1], index: 9, kind: input, shape index: {}]
  %s10 = inlined_call_operand.vmem [shape: bf16[8,16], index: 10, kind: input, shape index: {}]
  %s11 = inlined_call_operand.vmem [shape: f32[8,1], index: 11, kind: input, shape index: {}]
  %s12 = inlined_call_operand.vmem [shape: f32[8,1], index: 12, kind: input, shape index: {}]
  %s13 = inlined_call_operand.<no memory space> [shape: f32[1,1], index: 13, kind: input, shape index: {}]
  %s14 = inlined_call_operand.hbm [shape: f32[1,128], index: 14, kind: output, shape index: {}]
  %s15 = sld [smem:[#allocation0]]
  $region66: #{tpu_custom_call.1} parent=0
    _
  %s17 = ssub.s32 1, %s15
  %s18 = scalar_select 0, %s17, %s15
  %v19 = vstv %s13
  %20 = vst [vmem:[#allocation2] sm:$0x1] %v19
  $region1: #{tpu_custom_call.1} parent=0
    #allocation3 [shape = 'u8[512]{0}', space=vmem, size = 0x400, scoped, tag = 'output window, operand 0, single buffered']
    #allocation4 [shape = 's32[1]{0}', space=sflag, size = 0x4, scoped, tag = 'scoped memory for tpu_custom_call.1']
    %21 = vsyncpa [#allocation4], 0
    // Predicated region
    $region2: #{tpu_custom_call.1} parent=1 // pred_check
      _
    $region3: #{tpu_custom_call.1} parent=1 // pred_check_branch
      %23 = sbr.rel (0) target = $region5
    $region4: #{tpu_custom_call.1} parent=1 // pred_region
      _
    $region5: #{tpu_custom_call.1} parent=1 // pred_fallthru
      _
    // Predicated region
    $region6: #{tpu_custom_call.1} parent=1 // pred_check
      _
    $region7: #{tpu_custom_call.1} parent=1 // pred_check_branch
      %25 = sbr.rel (0) target = $region9
    $region8: #{tpu_custom_call.1} parent=1 // pred_region
      _
    $region9: #{tpu_custom_call.1} parent=1 // pred_fallthru
      _
    // Predicated region
    $region10: #{tpu_custom_call.1} parent=1 // pred_check
      _
    $region11: #{tpu_custom_call.1} parent=1 // pred_check_branch
      %27 = sbr.rel (0) target = $region13
    $region12: #{tpu_custom_call.1} parent=1 // pred_region
      _
    $region13: #{tpu_custom_call.1} parent=1 // pred_fallthru
      _
    // Predicated region
    $region14: #{tpu_custom_call.1} parent=1 // pred_check
      _
    $region15: #{tpu_custom_call.1} parent=1 // pred_check_branch
      %29 = sbr.rel (0) target = $region17
    $region16: #{tpu_custom_call.1} parent=1 // pred_region
      _
    $region17: #{tpu_custom_call.1} parent=1 // pred_fallthru
      _
    // Predicated region
    $region18: #{tpu_custom_call.1} parent=1 // pred_check
      _
    $region19: #{tpu_custom_call.1} parent=1 // pred_check_branch
      %31 = sbr.rel (0) target = $region21
    $region20: #{tpu_custom_call.1} parent=1 // pred_region
      _
    $region21: #{tpu_custom_call.1} parent=1 // pred_fallthru
      _
    // Predicated region
    $region22: #{tpu_custom_call.1} parent=1 // pred_check
      _
    $region23: #{tpu_custom_call.1} parent=1 // pred_check_branch
      %33 = sbr.rel (0) target = $region25
    $region24: #{tpu_custom_call.1} parent=1 // pred_region
      _
    $region25: #{tpu_custom_call.1} parent=1 // pred_fallthru
      _
    // Predicated region
    $region26: #{tpu_custom_call.1} parent=1 // pred_check
      _
    $region27: #{tpu_custom_call.1} parent=1 // pred_check_branch
      %35 = sbr.rel (0) target = $region29
    $region28: #{tpu_custom_call.1} parent=1 // pred_region
      _
    $region29: #{tpu_custom_call.1} parent=1 // pred_fallthru
      _
    // Predicated region
    $region30: #{tpu_custom_call.1} parent=1 // pred_check
      _
    $region31: #{tpu_custom_call.1} parent=1 // pred_check_branch
      %37 = sbr.rel (0) target = $region33
    $region32: #{tpu_custom_call.1} parent=1 // pred_region
      _
    $region33: #{tpu_custom_call.1} parent=1 // pred_fallthru
      _
    // Predicated region
    $region34: #{tpu_custom_call.1} parent=1 // pred_check
      _
    $region35: #{tpu_custom_call.1} parent=1 // pred_check_branch
      %39 = sbr.rel (0) target = $region37
    $region36: #{tpu_custom_call.1} parent=1 // pred_region
      _
    $region37: #{tpu_custom_call.1} parent=1 // pred_fallthru
      _
    // Predicated region
    $region38: #{tpu_custom_call.1} parent=1 // pred_check
      _
    $region39: #{tpu_custom_call.1} parent=1 // pred_check_branch
      %41 = sbr.rel (0) target = $region41
    $region40: #{tpu_custom_call.1} parent=1 // pred_region
      _
    $region41: #{tpu_custom_call.1} parent=1 // pred_fallthru
      _
    // Predicated region
    $region42: #{tpu_custom_call.1} parent=1 // pred_check
      _
    $region43: #{tpu_custom_call.1} parent=1 // pred_check_branch
      %43 = sbr.rel (0) target = $region45
    $region44: #{tpu_custom_call.1} parent=1 // pred_region
      _
    $region45: #{tpu_custom_call.1} parent=1 // pred_fallthru
      _
    // Predicated region
    $region46: #{tpu_custom_call.1} parent=1 // pred_check
      _
    $region47: #{tpu_custom_call.1} parent=1 // pred_check_branch
      %45 = sbr.rel (0) target = $region49
    $region48: #{tpu_custom_call.1} parent=1 // pred_region
      _
    $region49: #{tpu_custom_call.1} parent=1 // pred_fallthru
      _
    // Predicated region
    $region50: #{tpu_custom_call.1} parent=1 // pred_check
      _
    $region51: #{tpu_custom_call.1} parent=1 // pred_check_branch
      %47 = sbr.rel (0) target = $region53
    $region52: #{tpu_custom_call.1} parent=1 // pred_region
      _
    $region53: #{tpu_custom_call.1} parent=1 // pred_fallthru
      _
    // Predicated region
    $region54: #{tpu_custom_call.1} parent=1 // pred_check
      _
    $region55: #{tpu_custom_call.1} parent=1 // pred_check_branch
      %49 = sbr.rel (0) target = $region57
    $region56: #{tpu_custom_call.1} parent=1 // pred_region
      _
    $region57: #{tpu_custom_call.1} parent=1 // pred_fallthru
      _
    %v51 = vld [vmem:[%s1] sm:$0xff]
    %v52 = vld [vmem:[%s0] sm:$0x1]
    %54 = vset.pattern.permute.xlu0 0
    %55 = vperm.xlu0 %54, %v51
    %v56 = vpop.permute.xlu0 %55
    %v59 = vlaneseq
    %v60 = vshrl.u32 %v59, 7
    %v61 = vsub.s32 0, %v60
    %v62 = vrot.slane %v52, %v61
    %v64 = vmul.f32 %v56, %v62
    %v65 = vld [vmem:[%s2] sm:$0xff]
    %67 = vset.pattern.permute.xlu0 0
    %68 = vperm.xlu0 %67, %v65
    %v69 = vpop.permute.xlu0 %68
    %v71 = vadd.f32 %v64, %v69
    %v72 = vlaneseq
    %v73 = vand.u32 %v72, 127
    %74 = vrot.lane.b32.xlu0 %v71, 1
    %v75 = vpop.permute.xlu0 %74
    %v76 = vld [vmem:[%s3] sm:$0xf]
    %v77 = vld [vmem:[%s3 + $0x4] sm:$0xf]
    %v78 = vpack.c.bf16 %v75, %v75
    %v79 = vld [vmem:[%s4] sm:$0xf]
    %v80 = vld [vmem:[%s4 + $0x4] sm:$0xf]
    %v81 = vpack.c.bf16 %v71, %v71
    %v84 = vunpack.c.l.b16 %v79
    %v85 = vunpack.c.l.b16 %v80
    %v86 = vpack.c.b16 %v85, %v84
    %vm87 = vcmask 64512
    %v89 = vsel %vm87, %v86, 0
    %vm91 = vcmask 1043456
    %v93 = vsel %vm91, %v81, 0
    %95 = vmatprep.subr.bf16.mxu0 0
    %96 = vmatpush1.bf16.msra.mxu0 %v93
    %97 = vmatprep.subr.bf16.mxu0 0
    %98 = vmatpush1.bf16.msra.mxu0 0
    %99 = vmatprep.subr.bf16.mxu0 0
    %100 = vmatpush1.bf16.msra.mxu0 0
    %101 = vmatprep.subr.bf16.mxu0 0
    %102 = vmatpush1.bf16.msra.mxu0 0
    %103 = vmatprep.subr.bf16.mxu0 0
    %104 = vmatpush1.bf16.msra.mxu0 0
    %105 = vmatprep.subr.bf16.mxu0 0
    %106 = vmatpush1.bf16.msra.mxu0 0
    %107 = vmatprep.subr.bf16.mxu0 0
    %108 = vmatpush1.bf16.msra.mxu0 0
    %109 = vmatprep.subr.bf16.mxu0 0
    %110 = vmatpush1.bf16.msra.mxu0 0
    %111 = vmatprep.subr.bf16.mxu0 0
    %112 = vmatpush1.bf16.msra.mxu0 0
    %113 = vmatprep.subr.bf16.mxu0 0
    %114 = vmatpush1.bf16.msra.mxu0 0
    %115 = vmatprep.subr.bf16.mxu0 0
    %116 = vmatpush1.bf16.msra.mxu0 0
    %117 = vmatprep.subr.bf16.mxu0 0
    %118 = vmatpush1.bf16.msra.mxu0 0
    %119 = vmatprep.subr.bf16.mxu0 0
    %120 = vmatpush1.bf16.msra.mxu0 0
    %121 = vmatprep.subr.bf16.mxu0 0
    %122 = vmatpush1.bf16.msra.mxu0 0
    %123 = vmatprep.subr.bf16.mxu0 0
    %124 = vmatpush1.bf16.msra.mxu0 0
    %125 = vmatprep.subr.bf16.mxu0 0
    %126 = vmatpush1.bf16.msra.mxu0 0
    %127 = vmatprep.mubr.bf16.mxu0 0
    %128 = vmatmul.mubr.bf16.gmra.mrb[0].mxu0 %v89
    %v129 = vpop.f32.mrb[0].mxu0
    %v130 = vadd.f32 0.0, %v129
    %v131 = vpop.f32.mrb[0].mxu0
    %v132 = vpop.f32.mrb[0].mxu0
    %v133 = vadd.f32 0.0, %v132
    %v134 = vpop.f32.mrb[0].mxu0
    %135 = vdwg.mxu0
    %v138 = vunpack.c.l.b16 %v76
    %v139 = vunpack.c.l.b16 %v77
    %v140 = vpack.c.b16 %v139, %v138
    %v142 = vsel %vm87, %v140, 0
    %v145 = vsel %vm91, %v78, 0
    %147 = vmatprep.subr.bf16.mxu0 0
    %148 = vmatpush1.bf16.msra.mxu0 %v145
    %149 = vmatprep.subr.bf16.mxu0 0
    %150 = vmatpush1.bf16.msra.mxu0 0
    %151 = vmatprep.subr.bf16.mxu0 0
    %152 = vmatpush1.bf16.msra.mxu0 0
    %153 = vmatprep.subr.bf16.mxu0 0
    %154 = vmatpush1.bf16.msra.mxu0 0
    %155 = vmatprep.subr.bf16.mxu0 0
    %156 = vmatpush1.bf16.msra.mxu0 0
    %157 = vmatprep.subr.bf16.mxu0 0
    %158 = vmatpush1.bf16.msra.mxu0 0
    %159 = vmatprep.subr.bf16.mxu0 0
    %160 = vmatpush1.bf16.msra.mxu0 0
    %161 = vmatprep.subr.bf16.mxu0 0
    %162 = vmatpush1.bf16.msra.mxu0 0
    %163 = vmatprep.subr.bf16.mxu0 0
    %164 = vmatpush1.bf16.msra.mxu0 0
    %165 = vmatprep.subr.bf16.mxu0 0
    %166 = vmatpush1.bf16.msra.mxu0 0
    %167 = vmatprep.subr.bf16.mxu0 0
    %168 = vmatpush1.bf16.msra.mxu0 0
    %169 = vmatprep.subr.bf16.mxu0 0
    %170 = vmatpush1.bf16.msra.mxu0 0
    %171 = vmatprep.subr.bf16.mxu0 0
    %172 = vmatpush1.bf16.msra.mxu0 0
    %173 = vmatprep.subr.bf16.mxu0 0
    %174 = vmatpush1.bf16.msra.mxu0 0
    %175 = vmatprep.subr.bf16.mxu0 0
    %176 = vmatpush1.bf16.msra.mxu0 0
    %177 = vmatprep.subr.bf16.mxu0 0
    %178 = vmatpush1.bf16.msra.mxu0 0
    %179 = vmatprep.mubr.bf16.mxu0 0
    %180 = vmatmul.mubr.bf16.gmra.mrb[0].mxu0 %v142
    %v181 = vpop.f32.mrb[0].mxu0
    %v182 = vadd.f32 %v130, %v181
    %v183 = vpop.f32.mrb[0].mxu0
    %v184 = vpop.f32.mrb[0].mxu0
    %v185 = vadd.f32 %v133, %v184
    %v186 = vpop.f32.mrb[0].mxu0
    %187 = vdwg.mxu0
    %v188 = vld [vmem:[%s5] sm:$0xff]
    %v189 = vld [vmem:[%s5 + $0x8] sm:$0xff]
    %191 = vset.pattern.permute.xlu0 0
    %192 = vperm.xlu0 %191, %v188
    %v193 = vpop.permute.xlu0 %192
    %196 = vset.pattern.permute.xlu0 0
    %197 = vperm.xlu0 %196, %v189
    %v198 = vpop.permute.xlu0 %197
    %v200 = vadd.f32 %v182, %v193
    %v201 = vadd.f32 %v185, %v198
    %v202 = vtanh.pop %v200
    %v203 = vxor.u32 %v201, 2147483648
    %v204 = vmul.f32 %v203, 1.442695
    %v205 = vpow.pop %v204
    %v206 = vadd.f32 %v205, 1.0
    %v207 = vrcp.pop %v206
    %v208 = vmul.f32 1.0, %v207
    %v209 = vmul.f32 %v202, %v208
    %v210 = vld [vmem:[%s6] sm:$0xf]
    %v211 = vld [vmem:[%s6 + $0x4] sm:$0xf]
    %v212 = vld [vmem:[%s6 + $0x8] sm:$0xf]
    %v213 = vpack.c.bf16 %v209, %v209
    %v214 = vld [vmem:[%s7] sm:$0xff]
    %v215 = vld [vmem:[%s7 + $0x8] sm:$0xff]
    %v216 = vld [vmem:[%s7 + $0x10] sm:$0xff]
    %218 = vset.pattern.permute.xlu0 0
    %219 = vperm.xlu0 %218, %v214
    %v220 = vpop.permute.xlu0 %219
    %223 = vset.pattern.permute.xlu0 0
    %224 = vperm.xlu0 %223, %v215
    %v225 = vpop.permute.xlu0 %224
    %228 = vset.pattern.permute.xlu0 0
    %229 = vperm.xlu0 %228, %v216
    %v230 = vpop.permute.xlu0 %229
    %v235 = vunpack.c.l.b16 %v210
    %v236 = vunpack.c.l.b16 %v211
    %v237 = vunpack.c.l.b16 %v212
    %v238 = vpack.c.b16 %v236, %v235
    %v239 = vpack.c.b16 %v237, %v237
    %v241 = vsel %vm87, %v238, 0
    %v244 = vsel %vm87, %v239, 0
    %v247 = vsel %vm91, %v213, 0
    %249 = vmatprep.subr.bf16.mxu0 0
    %250 = vmatpush1.bf16.msra.mxu0 %v247
    %251 = vmatprep.subr.bf16.mxu0 0
    %252 = vmatpush1.bf16.msra.mxu0 0
    %253 = vmatprep.subr.bf16.mxu0 0
    %254 = vmatpush1.bf16.msra.mxu0 0
    %255 = vmatprep.subr.bf16.mxu0 0
    %256 = vmatpush1.bf16.msra.mxu0 0
    %257 = vmatprep.subr.bf16.mxu0 0
    %258 = vmatpush1.bf16.msra.mxu0 0
    %259 = vmatprep.subr.bf16.mxu0 0
    %260 = vmatpush1.bf16.msra.mxu0 0
    %261 = vmatprep.subr.bf16.mxu0 0
    %262 = vmatpush1.bf16.msra.mxu0 0
    %263 = vmatprep.subr.bf16.mxu0 0
    %264 = vmatpush1.bf16.msra.mxu0 0
    %265 = vmatprep.subr.bf16.mxu0 0
    %266 = vmatpush1.bf16.msra.mxu0 0
    %267 = vmatprep.subr.bf16.mxu0 0
    %268 = vmatpush1.bf16.msra.mxu0 0
    %269 = vmatprep.subr.bf16.mxu0 0
    %270 = vmatpush1.bf16.msra.mxu0 0
    %271 = vmatprep.subr.bf16.mxu0 0
    %272 = vmatpush1.bf16.msra.mxu0 0
    %273 = vmatprep.subr.bf16.mxu0 0
    %274 = vmatpush1.bf16.msra.mxu0 0
    %275 = vmatprep.subr.bf16.mxu0 0
    %276 = vmatpush1.bf16.msra.mxu0 0
    %277 = vmatprep.subr.bf16.mxu0 0
    %278 = vmatpush1.bf16.msra.mxu0 0
    %279 = vmatprep.subr.bf16.mxu0 0
    %280 = vmatpush1.bf16.msra.mxu0 0
    %281 = vmatprep.mubr.bf16.mxu0 0
    %282 = vmatmul.mubr.bf16.gmra.mrb[0].mxu0 %v241
    %v283 = vpop.f32.mrb[0].mxu0
    %v284 = vadd.f32 %v220, %v283
    %v285 = vpop.f32.mrb[0].mxu0
    %v286 = vpop.f32.mrb[0].mxu0
    %v287 = vadd.f32 %v225, %v286
    %v288 = vpop.f32.mrb[0].mxu0
    %289 = vmatprep.mubr.bf16.mxu0 0
    %290 = vmatmul.mubr.bf16.gmra.mrb[0].mxu0 %v244
    %v291 = vpop.f32.mrb[0].mxu0
    %v292 = vadd.f32 %v230, %v291
    %v293 = vpop.f32.mrb[0].mxu0
    %v294 = vpop.f32.mrb[0].mxu0
    %v295 = vpop.f32.mrb[0].mxu0
    %296 = vdwg.mxu0
    %v297 = vadd.f32 %v292, %v71
    %vm298 = vcmp.ge.s32.totalorder %v73, 107
    %v299 = vsel %vm298, 1, 0
    %vm300 = vcmp.eq.s32.totalorder %v299, 1
    %v301 = vsel %vm300, %v297, 0.0
    %302 = vrot.lane.b32.xlu0 %v301, 2
    %v303 = vpop.permute.xlu0 %302
    %s304 = scalar_lea.vmem %s3, 8
    %v305 = vld [vmem:[%s304] sm:$0xf]
    %v306 = vld [vmem:[%s304 + $0x4] sm:$0xf]
    %v307 = vpack.c.bf16 %v303, %v303
    %s308 = scalar_lea.vmem %s4, 8
    %v309 = vld [vmem:[%s308] sm:$0xf]
    %v310 = vld [vmem:[%s308 + $0x4] sm:$0xf]
    %v311 = vpack.c.bf16 %v301, %v301
    %v314 = vunpack.c.l.b16 %v309
    %v315 = vunpack.c.l.b16 %v310
    %v316 = vpack.c.b16 %v315, %v314
    %v318 = vsel %vm87, %v316, 0
    %v321 = vsel %vm91, %v311, 0
    %323 = vmatprep.subr.bf16.mxu0 0
    %324 = vmatpush1.bf16.msra.mxu0 %v321
    %325 = vmatprep.subr.bf16.mxu0 0
    %326 = vmatpush1.bf16.msra.mxu0 0
    %327 = vmatprep.subr.bf16.mxu0 0
    %328 = vmatpush1.bf16.msra.mxu0 0
    %329 = vmatprep.subr.bf16.mxu0 0
    %330 = vmatpush1.bf16.msra.mxu0 0
    %331 = vmatprep.subr.bf16.mxu0 0
    %332 = vmatpush1.bf16.msra.mxu0 0
    %333 = vmatprep.subr.bf16.mxu0 0
    %334 = vmatpush1.bf16.msra.mxu0 0
    %335 = vmatprep.subr.bf16.mxu0 0
    %336 = vmatpush1.bf16.msra.mxu0 0
    %337 = vmatprep.subr.bf16.mxu0 0
    %338 = vmatpush1.bf16.msra.mxu0 0
    %339 = vmatprep.subr.bf16.mxu0 0
    %340 = vmatpush1.bf16.msra.mxu0 0
    %341 = vmatprep.subr.bf16.mxu0 0
    %342 = vmatpush1.bf16.msra.mxu0 0
    %343 = vmatprep.subr.bf16.mxu0 0
    %344 = vmatpush1.bf16.msra.mxu0 0
    %345 = vmatprep.subr.bf16.mxu0 0
    %346 = vmatpush1.bf16.msra.mxu0 0
    %347 = vmatprep.subr.bf16.mxu0 0
    %348 = vmatpush1.bf16.msra.mxu0 0
    %349 = vmatprep.subr.bf16.mxu0 0
    %350 = vmatpush1.bf16.msra.mxu0 0
    %351 = vmatprep.subr.bf16.mxu0 0
    %352 = vmatpush1.bf16.msra.mxu0 0
    %353 = vmatprep.subr.bf16.mxu0 0
    %354 = vmatpush1.bf16.msra.mxu0 0
    %355 = vmatprep.mubr.bf16.mxu0 0
    %356 = vmatmul.mubr.bf16.gmra.mrb[0].mxu0 %v318
    %v357 = vpop.f32.mrb[0].mxu0
    %v358 = vadd.f32 0.0, %v357
    %v359 = vpop.f32.mrb[0].mxu0
    %v360 = vpop.f32.mrb[0].mxu0
    %v361 = vadd.f32 0.0, %v360
    %v362 = vpop.f32.mrb[0].mxu0
    %363 = vdwg.mxu0
    %v366 = vunpack.c.l.b16 %v305
    %v367 = vunpack.c.l.b16 %v306
    %v368 = vpack.c.b16 %v367, %v366
    %v370 = vsel %vm87, %v368, 0
    %v373 = vsel %vm91, %v307, 0
    %375 = vmatprep.subr.bf16.mxu0 0
    %376 = vmatpush1.bf16.msra.mxu0 %v373
    %377 = vmatprep.subr.bf16.mxu0 0
    %378 = vmatpush1.bf16.msra.mxu0 0
    %379 = vmatprep.subr.bf16.mxu0 0
    %380 = vmatpush1.bf16.msra.mxu0 0
    %381 = vmatprep.subr.bf16.mxu0 0
    %382 = vmatpush1.bf16.msra.mxu0 0
    %383 = vmatprep.subr.bf16.mxu0 0
    %384 = vmatpush1.bf16.msra.mxu0 0
    %385 = vmatprep.subr.bf16.mxu0 0
    %386 = vmatpush1.bf16.msra.mxu0 0
    %387 = vmatprep.subr.bf16.mxu0 0
    %388 = vmatpush1.bf16.msra.mxu0 0
    %389 = vmatprep.subr.bf16.mxu0 0
    %390 = vmatpush1.bf16.msra.mxu0 0
    %391 = vmatprep.subr.bf16.mxu0 0
    %392 = vmatpush1.bf16.msra.mxu0 0
    %393 = vmatprep.subr.bf16.mxu0 0
    %394 = vmatpush1.bf16.msra.mxu0 0
    %395 = vmatprep.subr.bf16.mxu0 0
    %396 = vmatpush1.bf16.msra.mxu0 0
    %397 = vmatprep.subr.bf16.mxu0 0
    %398 = vmatpush1.bf16.msra.mxu0 0
    %399 = vmatprep.subr.bf16.mxu0 0
    %400 = vmatpush1.bf16.msra.mxu0 0
    %401 = vmatprep.subr.bf16.mxu0 0
    %402 = vmatpush1.bf16.msra.mxu0 0
    %403 = vmatprep.subr.bf16.mxu0 0
    %404 = vmatpush1.bf16.msra.mxu0 0
    %405 = vmatprep.subr.bf16.mxu0 0
    %406 = vmatpush1.bf16.msra.mxu0 0
    %407 = vmatprep.mubr.bf16.mxu0 0
    %408 = vmatmul.mubr.bf16.gmra.mrb[0].mxu0 %v370
    %v409 = vpop.f32.mrb[0].mxu0
    %v410 = vadd.f32 %v358, %v409
    %v411 = vpop.f32.mrb[0].mxu0
    %v412 = vpop.f32.mrb[0].mxu0
    %v413 = vadd.f32 %v361, %v412
    %v414 = vpop.f32.mrb[0].mxu0
    %415 = vdwg.mxu0
    %s416 = scalar_lea.vmem %s5, 16
    %v417 = vld [vmem:[%s416] sm:$0xff]
    %v418 = vld [vmem:[%s416 + $0x8] sm:$0xff]
    %420 = vset.pattern.permute.xlu0 0
    %421 = vperm.xlu0 %420, %v417
    %v422 = vpop.permute.xlu0 %421
    %425 = vset.pattern.permute.xlu0 0
    %426 = vperm.xlu0 %425, %v418
    %v427 = vpop.permute.xlu0 %426
    %v429 = vadd.f32 %v410, %v422
    %v430 = vadd.f32 %v413, %v427
    %v431 = vtanh.pop %v429
    %v432 = vxor.u32 %v430, 2147483648
    %v433 = vmul.f32 %v432, 1.442695
    %v434 = vpow.pop %v433
    %v435 = vadd.f32 %v434, 1.0
    %v436 = vrcp.pop %v435
    %v437 = vmul.f32 1.0, %v436
    %v438 = vmul.f32 %v431, %v437
    %s439 = scalar_lea.vmem %s6, 12
    %v440 = vld [vmem:[%s439] sm:$0xf]
    %v441 = vld [vmem:[%s439 + $0x4] sm:$0xf]
    %v442 = vld [vmem:[%s439 + $0x8] sm:$0xf]
    %v443 = vpack.c.bf16 %v438, %v438
    %s444 = scalar_lea.vmem %s7, 24
    %v445 = vld [vmem:[%s444] sm:$0xff]
    %v446 = vld [vmem:[%s444 + $0x8] sm:$0xff]
    %v447 = vld [vmem:[%s444 + $0x10] sm:$0xff]
    %449 = vset.pattern.permute.xlu0 0
    %450 = vperm.xlu0 %449, %v445
    %v451 = vpop.permute.xlu0 %450
    %454 = vset.pattern.permute.xlu0 0
    %455 = vperm.xlu0 %454, %v446
    %v456 = vpop.permute.xlu0 %455
    %459 = vset.pattern.permute.xlu0 0
    %460 = vperm.xlu0 %459, %v447
    %v461 = vpop.permute.xlu0 %460
    %v466 = vunpack.c.l.b16 %v440
    %v467 = vunpack.c.l.b16 %v441
    %v468 = vunpack.c.l.b16 %v442
    %v469 = vpack.c.b16 %v467, %v466
    %v470 = vpack.c.b16 %v468, %v468
    %v472 = vsel %vm87, %v469, 0
    %v475 = vsel %vm87, %v470, 0
    %v478 = vsel %vm91, %v443, 0
    %480 = vmatprep.subr.bf16.mxu0 0
    %481 = vmatpush1.bf16.msra.mxu0 %v478
    %482 = vmatprep.subr.bf16.mxu0 0
    %483 = vmatpush1.bf16.msra.mxu0 0
    %484 = vmatprep.subr.bf16.mxu0 0
    %485 = vmatpush1.bf16.msra.mxu0 0
    %486 = vmatprep.subr.bf16.mxu0 0
    %487 = vmatpush1.bf16.msra.mxu0 0
    %488 = vmatprep.subr.bf16.mxu0 0
    %489 = vmatpush1.bf16.msra.mxu0 0
    %490 = vmatprep.subr.bf16.mxu0 0
    %491 = vmatpush1.bf16.msra.mxu0 0
    %492 = vmatprep.subr.bf16.mxu0 0
    %493 = vmatpush1.bf16.msra.mxu0 0
    %494 = vmatprep.subr.bf16.mxu0 0
    %495 = vmatpush1.bf16.msra.mxu0 0
    %496 = vmatprep.subr.bf16.mxu0 0
    %497 = vmatpush1.bf16.msra.mxu0 0
    %498 = vmatprep.subr.bf16.mxu0 0
    %499 = vmatpush1.bf16.msra.mxu0 0
    %500 = vmatprep.subr.bf16.mxu0 0
    %501 = vmatpush1.bf16.msra.mxu0 0
    %502 = vmatprep.subr.bf16.mxu0 0
    %503 = vmatpush1.bf16.msra.mxu0 0
    %504 = vmatprep.subr.bf16.mxu0 0
    %505 = vmatpush1.bf16.msra.mxu0 0
    %506 = vmatprep.subr.bf16.mxu0 0
    %507 = vmatpush1.bf16.msra.mxu0 0
    %508 = vmatprep.subr.bf16.mxu0 0
    %509 = vmatpush1.bf16.msra.mxu0 0
    %510 = vmatprep.subr.bf16.mxu0 0
    %511 = vmatpush1.bf16.msra.mxu0 0
    %512 = vmatprep.mubr.bf16.mxu0 0
    %513 = vmatmul.mubr.bf16.gmra.mrb[0].mxu0 %v472
    %v514 = vpop.f32.mrb[0].mxu0
    %v515 = vadd.f32 %v451, %v514
    %v516 = vpop.f32.mrb[0].mxu0
    %v517 = vpop.f32.mrb[0].mxu0
    %v518 = vadd.f32 %v456, %v517
    %v519 = vpop.f32.mrb[0].mxu0
    %520 = vmatprep.mubr.bf16.mxu0 0
    %521 = vmatmul.mubr.bf16.gmra.mrb[0].mxu0 %v475
    %v522 = vpop.f32.mrb[0].mxu0
    %v523 = vadd.f32 %v461, %v522
    %v524 = vpop.f32.mrb[0].mxu0
    %v525 = vpop.f32.mrb[0].mxu0
    %v526 = vpop.f32.mrb[0].mxu0
    %527 = vdwg.mxu0
    %v528 = vadd.f32 %v284, %v515
    %v529 = vadd.f32 %v287, %v518
    %v530 = vadd.f32 %v523, %v301
    %531 = vrot.lane.b32.xlu0 %v530, 4
    %v532 = vpop.permute.xlu0 %531
    %s533 = scalar_lea.vmem %s3, 16
    %v534 = vld [vmem:[%s533] sm:$0xf]
    %v535 = vld [vmem:[%s533 + $0x4] sm:$0xf]
    %v536 = vpack.c.bf16 %v532, %v532
    %s537 = scalar_lea.vmem %s4, 16
    %v538 = vld [vmem:[%s537] sm:$0xf]
    %v539 = vld [vmem:[%s537 + $0x4] sm:$0xf]
    %v540 = vpack.c.bf16 %v530, %v530
    %v543 = vunpack.c.l.b16 %v538
    %v544 = vunpack.c.l.b16 %v539
    %v545 = vpack.c.b16 %v544, %v543
    %v547 = vsel %vm87, %v545, 0
    %v550 = vsel %vm91, %v540, 0
    %552 = vmatprep.subr.bf16.mxu0 0
    %553 = vmatpush1.bf16.msra.mxu0 %v550
    %554 = vmatprep.subr.bf16.mxu0 0
    %555 = vmatpush1.bf16.msra.mxu0 0
    %556 = vmatprep.subr.bf16.mxu0 0
    %557 = vmatpush1.bf16.msra.mxu0 0
    %558 = vmatprep.subr.bf16.mxu0 0
    %559 = vmatpush1.bf16.msra.mxu0 0
    %560 = vmatprep.subr.bf16.mxu0 0
    %561 = vmatpush1.bf16.msra.mxu0 0
    %562 = vmatprep.subr.bf16.mxu0 0
    %563 = vmatpush1.bf16.msra.mxu0 0
    %564 = vmatprep.subr.bf16.mxu0 0
    %565 = vmatpush1.bf16.msra.mxu0 0
    %566 = vmatprep.subr.bf16.mxu0 0
    %567 = vmatpush1.bf16.msra.mxu0 0
    %568 = vmatprep.subr.bf16.mxu0 0
    %569 = vmatpush1.bf16.msra.mxu0 0
    %570 = vmatprep.subr.bf16.mxu0 0
    %571 = vmatpush1.bf16.msra.mxu0 0
    %572 = vmatprep.subr.bf16.mxu0 0
    %573 = vmatpush1.bf16.msra.mxu0 0
    %574 = vmatprep.subr.bf16.mxu0 0
    %575 = vmatpush1.bf16.msra.mxu0 0
    %576 = vmatprep.subr.bf16.mxu0 0
    %577 = vmatpush1.bf16.msra.mxu0 0
    %578 = vmatprep.subr.bf16.mxu0 0
    %579 = vmatpush1.bf16.msra.mxu0 0
    %580 = vmatprep.subr.bf16.mxu0 0
    %581 = vmatpush1.bf16.msra.mxu0 0
    %582 = vmatprep.subr.bf16.mxu0 0
    %583 = vmatpush1.bf16.msra.mxu0 0
    %584 = vmatprep.mubr.bf16.mxu0 0
    %585 = vmatmul.mubr.bf16.gmra.mrb[0].mxu0 %v547
    %v586 = vpop.f32.mrb[0].mxu0
    %v587 = vadd.f32 0.0, %v586
    %v588 = vpop.f32.mrb[0].mxu0
    %v589 = vpop.f32.mrb[0].mxu0
    %v590 = vadd.f32 0.0, %v589
    %v591 = vpop.f32.mrb[0].mxu0
    %592 = vdwg.mxu0
    %v595 = vunpack.c.l.b16 %v534
    %v596 = vunpack.c.l.b16 %v535
    %v597 = vpack.c.b16 %v596, %v595
    %v599 = vsel %vm87, %v597, 0
    %v602 = vsel %vm91, %v536, 0
    %604 = vmatprep.subr.bf16.mxu0 0
    %605 = vmatpush1.bf16.msra.mxu0 %v602
    %606 = vmatprep.subr.bf16.mxu0 0
    %607 = vmatpush1.bf16.msra.mxu0 0
    %608 = vmatprep.subr.bf16.mxu0 0
    %609 = vmatpush1.bf16.msra.mxu0 0
    %610 = vmatprep.subr.bf16.mxu0 0
    %611 = vmatpush1.bf16.msra.mxu0 0
    %612 = vmatprep.subr.bf16.mxu0 0
    %613 = vmatpush1.bf16.msra.mxu0 0
    %614 = vmatprep.subr.bf16.mxu0 0
    %615 = vmatpush1.bf16.msra.mxu0 0
    %616 = vmatprep.subr.bf16.mxu0 0
    %617 = vmatpush1.bf16.msra.mxu0 0
    %618 = vmatprep.subr.bf16.mxu0 0
    %619 = vmatpush1.bf16.msra.mxu0 0
    %620 = vmatprep.subr.bf16.mxu0 0
    %621 = vmatpush1.bf16.msra.mxu0 0
    %622 = vmatprep.subr.bf16.mxu0 0
    %623 = vmatpush1.bf16.msra.mxu0 0
    %624 = vmatprep.subr.bf16.mxu0 0
    %625 = vmatpush1.bf16.msra.mxu0 0
    %626 = vmatprep.subr.bf16.mxu0 0
    %627 = vmatpush1.bf16.msra.mxu0 0
    %628 = vmatprep.subr.bf16.mxu0 0
    %629 = vmatpush1.bf16.msra.mxu0 0
    %630 = vmatprep.subr.bf16.mxu0 0
    %631 = vmatpush1.bf16.msra.mxu0 0
    %632 = vmatprep.subr.bf16.mxu0 0
    %633 = vmatpush1.bf16.msra.mxu0 0
    %634 = vmatprep.subr.bf16.mxu0 0
    %635 = vmatpush1.bf16.msra.mxu0 0
    %636 = vmatprep.mubr.bf16.mxu0 0
    %637 = vmatmul.mubr.bf16.gmra.mrb[0].mxu0 %v599
    %v638 = vpop.f32.mrb[0].mxu0
    %v639 = vadd.f32 %v587, %v638
    %v640 = vpop.f32.mrb[0].mxu0
    %v641 = vpop.f32.mrb[0].mxu0
    %v642 = vadd.f32 %v590, %v641
    %v643 = vpop.f32.mrb[0].mxu0
    %644 = vdwg.mxu0
    %s645 = scalar_lea.vmem %s5, 32
    %v646 = vld [vmem:[%s645] sm:$0xff]
    %v647 = vld [vmem:[%s645 + $0x8] sm:$0xff]
    %649 = vset.pattern.permute.xlu0 0
    %650 = vperm.xlu0 %649, %v646
    %v651 = vpop.permute.xlu0 %650
    %654 = vset.pattern.permute.xlu0 0
    %655 = vperm.xlu0 %654, %v647
    %v656 = vpop.permute.xlu0 %655
    %v658 = vadd.f32 %v639, %v651
    %v659 = vadd.f32 %v642, %v656
    %v660 = vtanh.pop %v658
    %v661 = vxor.u32 %v659, 2147483648
    %v662 = vmul.f32 %v661, 1.442695
    %v663 = vpow.pop %v662
    %v664 = vadd.f32 %v663, 1.0
    %v665 = vrcp.pop %v664
    %v666 = vmul.f32 1.0, %v665
    %v667 = vmul.f32 %v660, %v666
    %s668 = scalar_lea.vmem %s6, 24
    %v669 = vld [vmem:[%s668] sm:$0xf]
    %v670 = vld [vmem:[%s668 + $0x4] sm:$0xf]
    %v671 = vld [vmem:[%s668 + $0x8] sm:$0xf]
    %v672 = vpack.c.bf16 %v667, %v667
    %s673 = scalar_lea.vmem %s7, 48
    %v674 = vld [vmem:[%s673] sm:$0xff]
    %v675 = vld [vmem:[%s673 + $0x8] sm:$0xff]
    %v676 = vld [vmem:[%s673 + $0x10] sm:$0xff]
    %678 = vset.pattern.permute.xlu0 0
    %679 = vperm.xlu0 %678, %v674
    %v680 = vpop.permute.xlu0 %679
    %683 = vset.pattern.permute.xlu0 0
    %684 = vperm.xlu0 %683, %v675
    %v685 = vpop.permute.xlu0 %684
    %688 = vset.pattern.permute.xlu0 0
    %689 = vperm.xlu0 %688, %v676
    %v690 = vpop.permute.xlu0 %689
    %v695 = vunpack.c.l.b16 %v669
    %v696 = vunpack.c.l.b16 %v670
    %v697 = vunpack.c.l.b16 %v671
    %v698 = vpack.c.b16 %v696, %v695
    %v699 = vpack.c.b16 %v697, %v697
    %v701 = vsel %vm87, %v698, 0
    %v704 = vsel %vm87, %v699, 0
    %v707 = vsel %vm91, %v672, 0
    %709 = vmatprep.subr.bf16.mxu0 0
    %710 = vmatpush1.bf16.msra.mxu0 %v707
    %711 = vmatprep.subr.bf16.mxu0 0
    %712 = vmatpush1.bf16.msra.mxu0 0
    %713 = vmatprep.subr.bf16.mxu0 0
    %714 = vmatpush1.bf16.msra.mxu0 0
    %715 = vmatprep.subr.bf16.mxu0 0
    %716 = vmatpush1.bf16.msra.mxu0 0
    %717 = vmatprep.subr.bf16.mxu0 0
    %718 = vmatpush1.bf16.msra.mxu0 0
    %719 = vmatprep.subr.bf16.mxu0 0
    %720 = vmatpush1.bf16.msra.mxu0 0
    %721 = vmatprep.subr.bf16.mxu0 0
    %722 = vmatpush1.bf16.msra.mxu0 0
    %723 = vmatprep.subr.bf16.mxu0 0
    %724 = vmatpush1.bf16.msra.mxu0 0
    %725 = vmatprep.subr.bf16.mxu0 0
    %726 = vmatpush1.bf16.msra.mxu0 0
    %727 = vmatprep.subr.bf16.mxu0 0
    %728 = vmatpush1.bf16.msra.mxu0 0
    %729 = vmatprep.subr.bf16.mxu0 0
    %730 = vmatpush1.bf16.msra.mxu0 0
    %731 = vmatprep.subr.bf16.mxu0 0
    %732 = vmatpush1.bf16.msra.mxu0 0
    %733 = vmatprep.subr.bf16.mxu0 0
    %734 = vmatpush1.bf16.msra.mxu0 0
    %735 = vmatprep.subr.bf16.mxu0 0
    %736 = vmatpush1.bf16.msra.mxu0 0
    %737 = vmatprep.subr.bf16.mxu0 0
    %738 = vmatpush1.bf16.msra.mxu0 0
    %739 = vmatprep.subr.bf16.mxu0 0
    %740 = vmatpush1.bf16.msra.mxu0 0
    %741 = vmatprep.mubr.bf16.mxu0 0
    %742 = vmatmul.mubr.bf16.gmra.mrb[0].mxu0 %v701
    %v743 = vpop.f32.mrb[0].mxu0
    %v744 = vadd.f32 %v680, %v743
    %v745 = vpop.f32.mrb[0].mxu0
    %v746 = vpop.f32.mrb[0].mxu0
    %v747 = vadd.f32 %v685, %v746
    %v748 = vpop.f32.mrb[0].mxu0
    %749 = vmatprep.mubr.bf16.mxu0 0
    %750 = vmatmul.mubr.bf16.gmra.mrb[0].mxu0 %v704
    %v751 = vpop.f32.mrb[0].mxu0
    %v752 = vadd.f32 %v690, %v751
    %v753 = vpop.f32.mrb[0].mxu0
    %v754 = vpop.f32.mrb[0].mxu0
    %v755 = vpop.f32.mrb[0].mxu0
    %756 = vdwg.mxu0
    %v757 = vadd.f32 %v528, %v744
    %v758 = vadd.f32 %v529, %v747
    %v759 = vadd.f32 %v752, %v530
    %760 = vrot.lane.b32.xlu0 %v759, 1
    %v761 = vpop.permute.xlu0 %760
    %s762 = scalar_lea.vmem %s3, 24
    %v763 = vld [vmem:[%s762] sm:$0xf]
    %v764 = vld [vmem:[%s762 + $0x4] sm:$0xf]
    %v765 = vpack.c.bf16 %v761, %v761
    %s766 = scalar_lea.vmem %s4, 24
    %v767 = vld [vmem:[%s766] sm:$0xf]
    %v768 = vld [vmem:[%s766 + $0x4] sm:$0xf]
    %v769 = vpack.c.bf16 %v759, %v759
    %v772 = vunpack.c.l.b16 %v767
    %v773 = vunpack.c.l.b16 %v768
    %v774 = vpack.c.b16 %v773, %v772
    %v776 = vsel %vm87, %v774, 0
    %v779 = vsel %vm91, %v769, 0
    %781 = vmatprep.subr.bf16.mxu0 0
    %782 = vmatpush1.bf16.msra.mxu0 %v779
    %783 = vmatprep.subr.bf16.mxu0 0
    %784 = vmatpush1.bf16.msra.mxu0 0
    %785 = vmatprep.subr.bf16.mxu0 0
    %786 = vmatpush1.bf16.msra.mxu0 0
    %787 = vmatprep.subr.bf16.mxu0 0
    %788 = vmatpush1.bf16.msra.mxu0 0
    %789 = vmatprep.subr.bf16.mxu0 0
    %790 = vmatpush1.bf16.msra.mxu0 0
    %791 = vmatprep.subr.bf16.mxu0 0
    %792 = vmatpush1.bf16.msra.mxu0 0
    %793 = vmatprep.subr.bf16.mxu0 0
    %794 = vmatpush1.bf16.msra.mxu0 0
    %795 = vmatprep.subr.bf16.mxu0 0
    %796 = vmatpush1.bf16.msra.mxu0 0
    %797 = vmatprep.subr.bf16.mxu0 0
    %798 = vmatpush1.bf16.msra.mxu0 0
    %799 = vmatprep.subr.bf16.mxu0 0
    %800 = vmatpush1.bf16.msra.mxu0 0
    %801 = vmatprep.subr.bf16.mxu0 0
    %802 = vmatpush1.bf16.msra.mxu0 0
    %803 = vmatprep.subr.bf16.mxu0 0
    %804 = vmatpush1.bf16.msra.mxu0 0
    %805 = vmatprep.subr.bf16.mxu0 0
    %806 = vmatpush1.bf16.msra.mxu0 0
    %807 = vmatprep.subr.bf16.mxu0 0
    %808 = vmatpush1.bf16.msra.mxu0 0
    %809 = vmatprep.subr.bf16.mxu0 0
    %810 = vmatpush1.bf16.msra.mxu0 0
    %811 = vmatprep.subr.bf16.mxu0 0
    %812 = vmatpush1.bf16.msra.mxu0 0
    %813 = vmatprep.mubr.bf16.mxu0 0
    %814 = vmatmul.mubr.bf16.gmra.mrb[0].mxu0 %v776
    %v815 = vpop.f32.mrb[0].mxu0
    %v816 = vadd.f32 0.0, %v815
    %v817 = vpop.f32.mrb[0].mxu0
    %v818 = vpop.f32.mrb[0].mxu0
    %v819 = vadd.f32 0.0, %v818
    %v820 = vpop.f32.mrb[0].mxu0
    %821 = vdwg.mxu0
    %v824 = vunpack.c.l.b16 %v763
    %v825 = vunpack.c.l.b16 %v764
    %v826 = vpack.c.b16 %v825, %v824
    %v828 = vsel %vm87, %v826, 0
    %v831 = vsel %vm91, %v765, 0
    %833 = vmatprep.subr.bf16.mxu0 0
    %834 = vmatpush1.bf16.msra.mxu0 %v831
    %835 = vmatprep.subr.bf16.mxu0 0
    %836 = vmatpush1.bf16.msra.mxu0 0
    %837 = vmatprep.subr.bf16.mxu0 0
    %838 = vmatpush1.bf16.msra.mxu0 0
    %839 = vmatprep.subr.bf16.mxu0 0
    %840 = vmatpush1.bf16.msra.mxu0 0
    %841 = vmatprep.subr.bf16.mxu0 0
    %842 = vmatpush1.bf16.msra.mxu0 0
    %843 = vmatprep.subr.bf16.mxu0 0
    %844 = vmatpush1.bf16.msra.mxu0 0
    %845 = vmatprep.subr.bf16.mxu0 0
    %846 = vmatpush1.bf16.msra.mxu0 0
    %847 = vmatprep.subr.bf16.mxu0 0
    %848 = vmatpush1.bf16.msra.mxu0 0
    %849 = vmatprep.subr.bf16.mxu0 0
    %850 = vmatpush1.bf16.msra.mxu0 0
    %851 = vmatprep.subr.bf16.mxu0 0
    %852 = vmatpush1.bf16.msra.mxu0 0
    %853 = vmatprep.subr.bf16.mxu0 0
    %854 = vmatpush1.bf16.msra.mxu0 0
    %855 = vmatprep.subr.bf16.mxu0 0
    %856 = vmatpush1.bf16.msra.mxu0 0
    %857 = vmatprep.subr.bf16.mxu0 0
    %858 = vmatpush1.bf16.msra.mxu0 0
    %859 = vmatprep.subr.bf16.mxu0 0
    %860 = vmatpush1.bf16.msra.mxu0 0
    %861 = vmatprep.subr.bf16.mxu0 0
    %862 = vmatpush1.bf16.msra.mxu0 0
    %863 = vmatprep.subr.bf16.mxu0 0
    %864 = vmatpush1.bf16.msra.mxu0 0
    %865 = vmatprep.mubr.bf16.mxu0 0
    %866 = vmatmul.mubr.bf16.gmra.mrb[0].mxu0 %v828
    %v867 = vpop.f32.mrb[0].mxu0
    %v868 = vadd.f32 %v816, %v867
    %v869 = vpop.f32.mrb[0].mxu0
    %v870 = vpop.f32.mrb[0].mxu0
    %v871 = vadd.f32 %v819, %v870
    %v872 = vpop.f32.mrb[0].mxu0
    %873 = vdwg.mxu0
    %s874 = scalar_lea.vmem %s5, 48
    %v875 = vld [vmem:[%s874] sm:$0xff]
    %v876 = vld [vmem:[%s874 + $0x8] sm:$0xff]
    %878 = vset.pattern.permute.xlu0 0
    %879 = vperm.xlu0 %878, %v875
    %v880 = vpop.permute.xlu0 %879
    %883 = vset.pattern.permute.xlu0 0
    %884 = vperm.xlu0 %883, %v876
    %v885 = vpop.permute.xlu0 %884
    %v887 = vadd.f32 %v868, %v880
    %v888 = vadd.f32 %v871, %v885
    %v889 = vtanh.pop %v887
    %v890 = vxor.u32 %v888, 2147483648
    %v891 = vmul.f32 %v890, 1.442695
    %v892 = vpow.pop %v891
    %v893 = vadd.f32 %v892, 1.0
    %v894 = vrcp.pop %v893
    %v895 = vmul.f32 1.0, %v894
    %v896 = vmul.f32 %v889, %v895
    %s897 = scalar_lea.vmem %s6, 36
    %v898 = vld [vmem:[%s897] sm:$0xf]
    %v899 = vld [vmem:[%s897 + $0x4] sm:$0xf]
    %v900 = vld [vmem:[%s897 + $0x8] sm:$0xf]
    %v901 = vpack.c.bf16 %v896, %v896
    %s902 = scalar_lea.vmem %s7, 72
    %v903 = vld [vmem:[%s902] sm:$0xff]
    %v904 = vld [vmem:[%s902 + $0x8] sm:$0xff]
    %v905 = vld [vmem:[%s902 + $0x10] sm:$0xff]
    %907 = vset.pattern.permute.xlu0 0
    %908 = vperm.xlu0 %907, %v903
    %v909 = vpop.permute.xlu0 %908
    %912 = vset.pattern.permute.xlu0 0
    %913 = vperm.xlu0 %912, %v904
    %v914 = vpop.permute.xlu0 %913
    %917 = vset.pattern.permute.xlu0 0
    %918 = vperm.xlu0 %917, %v905
    %v919 = vpop.permute.xlu0 %918
    %v924 = vunpack.c.l.b16 %v898
    %v925 = vunpack.c.l.b16 %v899
    %v926 = vunpack.c.l.b16 %v900
    %v927 = vpack.c.b16 %v925, %v924
    %v928 = vpack.c.b16 %v926, %v926
    %v930 = vsel %vm87, %v927, 0
    %v933 = vsel %vm87, %v928, 0
    %v936 = vsel %vm91, %v901, 0
    %938 = vmatprep.subr.bf16.mxu0 0
    %939 = vmatpush1.bf16.msra.mxu0 %v936
    %940 = vmatprep.subr.bf16.mxu0 0
    %941 = vmatpush1.bf16.msra.mxu0 0
    %942 = vmatprep.subr.bf16.mxu0 0
    %943 = vmatpush1.bf16.msra.mxu0 0
    %944 = vmatprep.subr.bf16.mxu0 0
    %945 = vmatpush1.bf16.msra.mxu0 0
    %946 = vmatprep.subr.bf16.mxu0 0
    %947 = vmatpush1.bf16.msra.mxu0 0
    %948 = vmatprep.subr.bf16.mxu0 0
    %949 = vmatpush1.bf16.msra.mxu0 0
    %950 = vmatprep.subr.bf16.mxu0 0
    %951 = vmatpush1.bf16.msra.mxu0 0
    %952 = vmatprep.subr.bf16.mxu0 0
    %953 = vmatpush1.bf16.msra.mxu0 0
    %954 = vmatprep.subr.bf16.mxu0 0
    %955 = vmatpush1.bf16.msra.mxu0 0
    %956 = vmatprep.subr.bf16.mxu0 0
    %957 = vmatpush1.bf16.msra.mxu0 0
    %958 = vmatprep.subr.bf16.mxu0 0
    %959 = vmatpush1.bf16.msra.mxu0 0
    %960 = vmatprep.subr.bf16.mxu0 0
    %961 = vmatpush1.bf16.msra.mxu0 0
    %962 = vmatprep.subr.bf16.mxu0 0
    %963 = vmatpush1.bf16.msra.mxu0 0
    %964 = vmatprep.subr.bf16.mxu0 0
    %965 = vmatpush1.bf16.msra.mxu0 0
    %966 = vmatprep.subr.bf16.mxu0 0
    %967 = vmatpush1.bf16.msra.mxu0 0
    %968 = vmatprep.subr.bf16.mxu0 0
    %969 = vmatpush1.bf16.msra.mxu0 0
    %970 = vmatprep.mubr.bf16.mxu0 0
    %971 = vmatmul.mubr.bf16.gmra.mrb[0].mxu0 %v930
    %v972 = vpop.f32.mrb[0].mxu0
    %v973 = vadd.f32 %v909, %v972
    %v974 = vpop.f32.mrb[0].mxu0
    %v975 = vpop.f32.mrb[0].mxu0
    %v976 = vadd.f32 %v914, %v975
    %v977 = vpop.f32.mrb[0].mxu0
    %978 = vmatprep.mubr.bf16.mxu0 0
    %979 = vmatmul.mubr.bf16.gmra.mrb[0].mxu0 %v933
    %v980 = vpop.f32.mrb[0].mxu0
    %v981 = vadd.f32 %v919, %v980
    %v982 = vpop.f32.mrb[0].mxu0
    %v983 = vpop.f32.mrb[0].mxu0
    %v984 = vpop.f32.mrb[0].mxu0
    %985 = vdwg.mxu0
    %v986 = vadd.f32 %v757, %v973
    %v987 = vadd.f32 %v758, %v976
    %v988 = vadd.f32 %v981, %v759
    %vm989 = vcmp.ge.s32.totalorder %v73, 113
    %v990 = vsel %vm989, 1, 0
    %vm991 = vcmp.eq.s32.totalorder %v990, 1
    %v992 = vsel %vm991, %v988, 0.0
    %993 = vrot.lane.b32.xlu0 %v992, 2
    %v994 = vpop.permute.xlu0 %993
    %s995 = scalar_lea.vmem %s3, 32
    %v996 = vld [vmem:[%s995] sm:$0xf]
    %v997 = vld [vmem:[%s995 + $0x4] sm:$0xf]
    %v998 = vpack.c.bf16 %v994, %v994
    %s999 = scalar_lea.vmem %s4, 32
    %v1000 = vld [vmem:[%s999] sm:$0xf]
    %v1001 = vld [vmem:[%s999 + $0x4] sm:$0xf]
    %v1002 = vpack.c.bf16 %v992, %v992
    %v1005 = vunpack.c.l.b16 %v1000
    %v1006 = vunpack.c.l.b16 %v1001
    %v1007 = vpack.c.b16 %v1006, %v1005
    %v1009 = vsel %vm87, %v1007, 0
    %v1012 = vsel %vm91, %v1002, 0
    %1014 = vmatprep.subr.bf16.mxu0 0
    %1015 = vmatpush1.bf16.msra.mxu0 %v1012
    %1016 = vmatprep.subr.bf16.mxu0 0
    %1017 = vmatpush1.bf16.msra.mxu0 0
    %1018 = vmatprep.subr.bf16.mxu0 0
    %1019 = vmatpush1.bf16.msra.mxu0 0
    %1020 = vmatprep.subr.bf16.mxu0 0
    %1021 = vmatpush1.bf16.msra.mxu0 0
    %1022 = vmatprep.subr.bf16.mxu0 0
    %1023 = vmatpush1.bf16.msra.mxu0 0
    %1024 = vmatprep.subr.bf16.mxu0 0
    %1025 = vmatpush1.bf16.msra.mxu0 0
    %1026 = vmatprep.subr.bf16.mxu0 0
    %1027 = vmatpush1.bf16.msra.mxu0 0
    %1028 = vmatprep.subr.bf16.mxu0 0
    %1029 = vmatpush1.bf16.msra.mxu0 0
    %1030 = vmatprep.subr.bf16.mxu0 0
    %1031 = vmatpush1.bf16.msra.mxu0 0
    %1032 = vmatprep.subr.bf16.mxu0 0
    %1033 = vmatpush1.bf16.msra.mxu0 0
    %1034 = vmatprep.subr.bf16.mxu0 0
    %1035 = vmatpush1.bf16.msra.mxu0 0
    %1036 = vmatprep.subr.bf16.mxu0 0
    %1037 = vmatpush1.bf16.msra.mxu0 0
    %1038 = vmatprep.subr.bf16.mxu0 0
    %1039 = vmatpush1.bf16.msra.mxu0 0
    %1040 = vmatprep.subr.bf16.mxu0 0
    %1041 = vmatpush1.bf16.msra.mxu0 0
    %1042 = vmatprep.subr.bf16.mxu0 0
    %1043 = vmatpush1.bf16.msra.mxu0 0
    %1044 = vmatprep.subr.bf16.mxu0 0
    %1045 = vmatpush1.bf16.msra.mxu0 0
    %1046 = vmatprep.mubr.bf16.mxu0 0
    %1047 = vmatmul.mubr.bf16.gmra.mrb[0].mxu0 %v1009
    %v1048 = vpop.f32.mrb[0].mxu0
    %v1049 = vadd.f32 0.0, %v1048
    %v1050 = vpop.f32.mrb[0].mxu0
    %v1051 = vpop.f32.mrb[0].mxu0
    %v1052 = vadd.f32 0.0, %v1051
    %v1053 = vpop.f32.mrb[0].mxu0
    %1054 = vdwg.mxu0
    %v1057 = vunpack.c.l.b16 %v996
    %v1058 = vunpack.c.l.b16 %v997
    %v1059 = vpack.c.b16 %v1058, %v1057
    %v1061 = vsel %vm87, %v1059, 0
    %v1064 = vsel %vm91, %v998, 0
    %1066 = vmatprep.subr.bf16.mxu0 0
    %1067 = vmatpush1.bf16.msra.mxu0 %v1064
    %1068 = vmatprep.subr.bf16.mxu0 0
    %1069 = vmatpush1.bf16.msra.mxu0 0
    %1070 = vmatprep.subr.bf16.mxu0 0
    %1071 = vmatpush1.bf16.msra.mxu0 0
    %1072 = vmatprep.subr.bf16.mxu0 0
    %1073 = vmatpush1.bf16.msra.mxu0 0
    %1074 = vmatprep.subr.bf16.mxu0 0
    %1075 = vmatpush1.bf16.msra.mxu0 0
    %1076 = vmatprep.subr.bf16.mxu0 0
    %1077 = vmatpush1.bf16.msra.mxu0 0
    %1078 = vmatprep.subr.bf16.mxu0 0
    %1079 = vmatpush1.bf16.msra.mxu0 0
    %1080 = vmatprep.subr.bf16.mxu0 0
    %1081 = vmatpush1.bf16.msra.mxu0 0
    %1082 = vmatprep.subr.bf16.mxu0 0
    %1083 = vmatpush1.bf16.msra.mxu0 0
    %1084 = vmatprep.subr.bf16.mxu0 0
    %1085 = vmatpush1.bf16.msra.mxu0 0
    %1086 = vmatprep.subr.bf16.mxu0 0
    %1087 = vmatpush1.bf16.msra.mxu0 0
    %1088 = vmatprep.subr.bf16.mxu0 0
    %1089 = vmatpush1.bf16.msra.mxu0 0
    %1090 = vmatprep.subr.bf16.mxu0 0
    %1091 = vmatpush1.bf16.msra.mxu0 0
    %1092 = vmatprep.subr.bf16.mxu0 0
    %1093 = vmatpush1.bf16.msra.mxu0 0
    %1094 = vmatprep.subr.bf16.mxu0 0
    %1095 = vmatpush1.bf16.msra.mxu0 0
    %1096 = vmatprep.subr.bf16.mxu0 0
    %1097 = vmatpush1.bf16.msra.mxu0 0
    %1098 = vmatprep.mubr.bf16.mxu0 0
    %1099 = vmatmul.mubr.bf16.gmra.mrb[0].mxu0 %v1061
    %v1100 = vpop.f32.mrb[0].mxu0
    %v1101 = vadd.f32 %v1049, %v1100
    %v1102 = vpop.f32.mrb[0].mxu0
    %v1103 = vpop.f32.mrb[0].mxu0
    %v1104 = vadd.f32 %v1052, %v1103
    %v1105 = vpop.f32.mrb[0].mxu0
    %1106 = vdwg.mxu0
    %s1107 = scalar_lea.vmem %s5, 64
    %v1108 = vld [vmem:[%s1107] sm:$0xff]
    %v1109 = vld [vmem:[%s1107 + $0x8] sm:$0xff]
    %1111 = vset.pattern.permute.xlu0 0
    %1112 = vperm.xlu0 %1111, %v1108
    %v1113 = vpop.permute.xlu0 %1112
    %1116 = vset.pattern.permute.xlu0 0
    %1117 = vperm.xlu0 %1116, %v1109
    %v1118 = vpop.permute.xlu0 %1117
    %v1120 = vadd.f32 %v1101, %v1113
    %v1121 = vadd.f32 %v1104, %v1118
    %v1122 = vtanh.pop %v1120
    %v1123 = vxor.u32 %v1121, 2147483648
    %v1124 = vmul.f32 %v1123, 1.442695
    %v1125 = vpow.pop %v1124
    %v1126 = vadd.f32 %v1125, 1.0
    %v1127 = vrcp.pop %v1126
    %v1128 = vmul.f32 1.0, %v1127
    %v1129 = vmul.f32 %v1122, %v1128
    %s1130 = scalar_lea.vmem %s6, 48
    %v1131 = vld [vmem:[%s1130] sm:$0xf]
    %v1132 = vld [vmem:[%s1130 + $0x4] sm:$0xf]
    %v1133 = vld [vmem:[%s1130 + $0x8] sm:$0xf]
    %v1134 = vpack.c.bf16 %v1129, %v1129
    %s1135 = scalar_lea.vmem %s7, 96
    %v1136 = vld [vmem:[%s1135] sm:$0xff]
    %v1137 = vld [vmem:[%s1135 + $0x8] sm:$0xff]
    %v1138 = vld [vmem:[%s1135 + $0x10] sm:$0xff]
    %1140 = vset.pattern.permute.xlu0 0
    %1141 = vperm.xlu0 %1140, %v1136
    %v1142 = vpop.permute.xlu0 %1141
    %1145 = vset.pattern.permute.xlu0 0
    %1146 = vperm.xlu0 %1145, %v1137
    %v1147 = vpop.permute.xlu0 %1146
    %1150 = vset.pattern.permute.xlu0 0
    %1151 = vperm.xlu0 %1150, %v1138
    %v1152 = vpop.permute.xlu0 %1151
    %v1157 = vunpack.c.l.b16 %v1131
    %v1158 = vunpack.c.l.b16 %v1132
    %v1159 = vunpack.c.l.b16 %v1133
    %v1160 = vpack.c.b16 %v1158, %v1157
    %v1161 = vpack.c.b16 %v1159, %v1159
    %v1163 = vsel %vm87, %v1160, 0
    %v1166 = vsel %vm87, %v1161, 0
    %v1169 = vsel %vm91, %v1134, 0
    %1171 = vmatprep.subr.bf16.mxu0 0
    %1172 = vmatpush1.bf16.msra.mxu0 %v1169
    %1173 = vmatprep.subr.bf16.mxu0 0
    %1174 = vmatpush1.bf16.msra.mxu0 0
    %1175 = vmatprep.subr.bf16.mxu0 0
    %1176 = vmatpush1.bf16.msra.mxu0 0
    %1177 = vmatprep.subr.bf16.mxu0 0
    %1178 = vmatpush1.bf16.msra.mxu0 0
    %1179 = vmatprep.subr.bf16.mxu0 0
    %1180 = vmatpush1.bf16.msra.mxu0 0
    %1181 = vmatprep.subr.bf16.mxu0 0
    %1182 = vmatpush1.bf16.msra.mxu0 0
    %1183 = vmatprep.subr.bf16.mxu0 0
    %1184 = vmatpush1.bf16.msra.mxu0 0
    %1185 = vmatprep.subr.bf16.mxu0 0
    %1186 = vmatpush1.bf16.msra.mxu0 0
    %1187 = vmatprep.subr.bf16.mxu0 0
    %1188 = vmatpush1.bf16.msra.mxu0 0
    %1189 = vmatprep.subr.bf16.mxu0 0
    %1190 = vmatpush1.bf16.msra.mxu0 0
    %1191 = vmatprep.subr.bf16.mxu0 0
    %1192 = vmatpush1.bf16.msra.mxu0 0
    %1193 = vmatprep.subr.bf16.mxu0 0
    %1194 = vmatpush1.bf16.msra.mxu0 0
    %1195 = vmatprep.subr.bf16.mxu0 0
    %1196 = vmatpush1.bf16.msra.mxu0 0
    %1197 = vmatprep.subr.bf16.mxu0 0
    %1198 = vmatpush1.bf16.msra.mxu0 0
    %1199 = vmatprep.subr.bf16.mxu0 0
    %1200 = vmatpush1.bf16.msra.mxu0 0
    %1201 = vmatprep.subr.bf16.mxu0 0
    %1202 = vmatpush1.bf16.msra.mxu0 0
    %1203 = vmatprep.mubr.bf16.mxu0 0
    %1204 = vmatmul.mubr.bf16.gmra.mrb[0].mxu0 %v1163
    %v1205 = vpop.f32.mrb[0].mxu0
    %v1206 = vadd.f32 %v1142, %v1205
    %v1207 = vpop.f32.mrb[0].mxu0
    %v1208 = vpop.f32.mrb[0].mxu0
    %v1209 = vadd.f32 %v1147, %v1208
    %v1210 = vpop.f32.mrb[0].mxu0
    %1211 = vmatprep.mubr.bf16.mxu0 0
    %1212 = vmatmul.mubr.bf16.gmra.mrb[0].mxu0 %v1166
    %v1213 = vpop.f32.mrb[0].mxu0
    %v1214 = vadd.f32 %v1152, %v1213
    %v1215 = vpop.f32.mrb[0].mxu0
    %v1216 = vpop.f32.mrb[0].mxu0
    %v1217 = vpop.f32.mrb[0].mxu0
    %1218 = vdwg.mxu0
    %v1219 = vadd.f32 %v986, %v1206
    %v1220 = vadd.f32 %v987, %v1209
    %v1221 = vadd.f32 %v1214, %v992
    %vm1222 = vcmp.ge.s32.totalorder %v73, 114
    %v1223 = vsel %vm1222, 1, 0
    %vm1224 = vcmp.eq.s32.totalorder %v1223, 1
    %v1225 = vsel %vm1224, %v1221, 0.0
    %1226 = vrot.lane.b32.xlu0 %v1225, 4
    %v1227 = vpop.permute.xlu0 %1226
    %s1228 = scalar_lea.vmem %s3, 40
    %v1229 = vld [vmem:[%s1228] sm:$0xf]
    %v1230 = vld [vmem:[%s1228 + $0x4] sm:$0xf]
    %v1231 = vpack.c.bf16 %v1227, %v1227
    %s1232 = scalar_lea.vmem %s4, 40
    %v1233 = vld [vmem:[%s1232] sm:$0xf]
    %v1234 = vld [vmem:[%s1232 + $0x4] sm:$0xf]
    %v1235 = vpack.c.bf16 %v1225, %v1225
    %v1238 = vunpack.c.l.b16 %v1233
    %v1239 = vunpack.c.l.b16 %v1234
    %v1240 = vpack.c.b16 %v1239, %v1238
    %v1242 = vsel %vm87, %v1240, 0
    %v1245 = vsel %vm91, %v1235, 0
    %1247 = vmatprep.subr.bf16.mxu0 0
    %1248 = vmatpush1.bf16.msra.mxu0 %v1245
    %1249 = vmatprep.subr.bf16.mxu0 0
    %1250 = vmatpush1.bf16.msra.mxu0 0
    %1251 = vmatprep.subr.bf16.mxu0 0
    %1252 = vmatpush1.bf16.msra.mxu0 0
    %1253 = vmatprep.subr.bf16.mxu0 0
    %1254 = vmatpush1.bf16.msra.mxu0 0
    %1255 = vmatprep.subr.bf16.mxu0 0
    %1256 = vmatpush1.bf16.msra.mxu0 0
    %1257 = vmatprep.subr.bf16.mxu0 0
    %1258 = vmatpush1.bf16.msra.mxu0 0
    %1259 = vmatprep.subr.bf16.mxu0 0
    %1260 = vmatpush1.bf16.msra.mxu0 0
    %1261 = vmatprep.subr.bf16.mxu0 0
    %1262 = vmatpush1.bf16.msra.mxu0 0
    %1263 = vmatprep.subr.bf16.mxu0 0
    %1264 = vmatpush1.bf16.msra.mxu0 0
    %1265 = vmatprep.subr.bf16.mxu0 0
    %1266 = vmatpush1.bf16.msra.mxu0 0
    %1267 = vmatprep.subr.bf16.mxu0 0
    %1268 = vmatpush1.bf16.msra.mxu0 0
    %1269 = vmatprep.subr.bf16.mxu0 0
    %1270 = vmatpush1.bf16.msra.mxu0 0
    %1271 = vmatprep.subr.bf16.mxu0 0
    %1272 = vmatpush1.bf16.msra.mxu0 0
    %1273 = vmatprep.subr.bf16.mxu0 0
    %1274 = vmatpush1.bf16.msra.mxu0 0
    %1275 = vmatprep.subr.bf16.mxu0 0
    %1276 = vmatpush1.bf16.msra.mxu0 0
    %1277 = vmatprep.subr.bf16.mxu0 0
    %1278 = vmatpush1.bf16.msra.mxu0 0
    %1279 = vmatprep.mubr.bf16.mxu0 0
    %1280 = vmatmul.mubr.bf16.gmra.mrb[0].mxu0 %v1242
    %v1281 = vpop.f32.mrb[0].mxu0
    %v1282 = vadd.f32 0.0, %v1281
    %v1283 = vpop.f32.mrb[0].mxu0
    %v1284 = vpop.f32.mrb[0].mxu0
    %v1285 = vadd.f32 0.0, %v1284
    %v1286 = vpop.f32.mrb[0].mxu0
    %1287 = vdwg.mxu0
    %v1290 = vunpack.c.l.b16 %v1229
    %v1291 = vunpack.c.l.b16 %v1230
    %v1292 = vpack.c.b16 %v1291, %v1290
    %v1294 = vsel %vm87, %v1292, 0
    %v1297 = vsel %vm91, %v1231, 0
    %1299 = vmatprep.subr.bf16.mxu0 0
    %1300 = vmatpush1.bf16.msra.mxu0 %v1297
    %1301 = vmatprep.subr.bf16.mxu0 0
    %1302 = vmatpush1.bf16.msra.mxu0 0
    %1303 = vmatprep.subr.bf16.mxu0 0
    %1304 = vmatpush1.bf16.msra.mxu0 0
    %1305 = vmatprep.subr.bf16.mxu0 0
    %1306 = vmatpush1.bf16.msra.mxu0 0
    %1307 = vmatprep.subr.bf16.mxu0 0
    %1308 = vmatpush1.bf16.msra.mxu0 0
    %1309 = vmatprep.subr.bf16.mxu0 0
    %1310 = vmatpush1.bf16.msra.mxu0 0
    %1311 = vmatprep.subr.bf16.mxu0 0
    %1312 = vmatpush1.bf16.msra.mxu0 0
    %1313 = vmatprep.subr.bf16.mxu0 0
    %1314 = vmatpush1.bf16.msra.mxu0 0
    %1315 = vmatprep.subr.bf16.mxu0 0
    %1316 = vmatpush1.bf16.msra.mxu0 0
    %1317 = vmatprep.subr.bf16.mxu0 0
    %1318 = vmatpush1.bf16.msra.mxu0 0
    %1319 = vmatprep.subr.bf16.mxu0 0
    %1320 = vmatpush1.bf16.msra.mxu0 0
    %1321 = vmatprep.subr.bf16.mxu0 0
    %1322 = vmatpush1.bf16.msra.mxu0 0
    %1323 = vmatprep.subr.bf16.mxu0 0
    %1324 = vmatpush1.bf16.msra.mxu0 0
    %1325 = vmatprep.subr.bf16.mxu0 0
    %1326 = vmatpush1.bf16.msra.mxu0 0
    %1327 = vmatprep.subr.bf16.mxu0 0
    %1328 = vmatpush1.bf16.msra.mxu0 0
    %1329 = vmatprep.subr.bf16.mxu0 0
    %1330 = vmatpush1.bf16.msra.mxu0 0
    %1331 = vmatprep.mubr.bf16.mxu0 0
    %1332 = vmatmul.mubr.bf16.gmra.mrb[0].mxu0 %v1294
    %v1333 = vpop.f32.mrb[0].mxu0
    %v1334 = vadd.f32 %v1282, %v1333
    %v1335 = vpop.f32.mrb[0].mxu0
    %v1336 = vpop.f32.mrb[0].mxu0
    %v1337 = vadd.f32 %v1285, %v1336
    %v1338 = vpop.f32.mrb[0].mxu0
    %1339 = vdwg.mxu0
    %s1340 = scalar_lea.vmem %s5, 80
    %v1341 = vld [vmem:[%s1340] sm:$0xff]
    %v1342 = vld [vmem:[%s1340 + $0x8] sm:$0xff]
    %1344 = vset.pattern.permute.xlu0 0
    %1345 = vperm.xlu0 %1344, %v1341
    %v1346 = vpop.permute.xlu0 %1345
    %1349 = vset.pattern.permute.xlu0 0
    %1350 = vperm.xlu0 %1349, %v1342
    %v1351 = vpop.permute.xlu0 %1350
    %v1353 = vadd.f32 %v1334, %v1346
    %v1354 = vadd.f32 %v1337, %v1351
    %v1355 = vtanh.pop %v1353
    %v1356 = vxor.u32 %v1354, 2147483648
    %v1357 = vmul.f32 %v1356, 1.442695
    %v1358 = vpow.pop %v1357
    %v1359 = vadd.f32 %v1358, 1.0
    %v1360 = vrcp.pop %v1359
    %v1361 = vmul.f32 1.0, %v1360
    %v1362 = vmul.f32 %v1355, %v1361
    %s1363 = scalar_lea.vmem %s6, 60
    %v1364 = vld [vmem:[%s1363] sm:$0xf]
    %v1365 = vld [vmem:[%s1363 + $0x4] sm:$0xf]
    %v1366 = vld [vmem:[%s1363 + $0x8] sm:$0xf]
    %v1367 = vpack.c.bf16 %v1362, %v1362
    %s1368 = scalar_lea.vmem %s7, 120
    %v1369 = vld [vmem:[%s1368] sm:$0xff]
    %v1370 = vld [vmem:[%s1368 + $0x8] sm:$0xff]
    %v1371 = vld [vmem:[%s1368 + $0x10] sm:$0xff]
    %1373 = vset.pattern.permute.xlu0 0
    %1374 = vperm.xlu0 %1373, %v1369
    %v1375 = vpop.permute.xlu0 %1374
    %1378 = vset.pattern.permute.xlu0 0
    %1379 = vperm.xlu0 %1378, %v1370
    %v1380 = vpop.permute.xlu0 %1379
    %1383 = vset.pattern.permute.xlu0 0
    %1384 = vperm.xlu0 %1383, %v1371
    %v1385 = vpop.permute.xlu0 %1384
    %v1389 = vunpack.c.l.b16 %v1364
    %v1390 = vunpack.c.l.b16 %v1365
    %v1391 = vunpack.c.l.b16 %v1366
    %v1392 = vpack.c.b16 %v1390, %v1389
    %v1393 = vpack.c.b16 %v1391, %v1391
    %v1395 = vsel %vm87, %v1392, 0
    %v1398 = vsel %vm87, %v1393, 0
    %v1401 = vsel %vm91, %v1367, 0
    %1403 = vmatprep.subr.bf16.mxu0 0
    %1404 = vmatpush1.bf16.msra.mxu0 %v1401
    %1405 = vmatprep.subr.bf16.mxu0 0
    %1406 = vmatpush1.bf16.msra.mxu0 0
    %1407 = vmatprep.subr.bf16.mxu0 0
    %1408 = vmatpush1.bf16.msra.mxu0 0
    %1409 = vmatprep.subr.bf16.mxu0 0
    %1410 = vmatpush1.bf16.msra.mxu0 0
    %1411 = vmatprep.subr.bf16.mxu0 0
    %1412 = vmatpush1.bf16.msra.mxu0 0
    %1413 = vmatprep.subr.bf16.mxu0 0
    %1414 = vmatpush1.bf16.msra.mxu0 0
    %1415 = vmatprep.subr.bf16.mxu0 0
    %1416 = vmatpush1.bf16.msra.mxu0 0
    %1417 = vmatprep.subr.bf16.mxu0 0
    %1418 = vmatpush1.bf16.msra.mxu0 0
    %1419 = vmatprep.subr.bf16.mxu0 0
    %1420 = vmatpush1.bf16.msra.mxu0 0
    %1421 = vmatprep.subr.bf16.mxu0 0
    %1422 = vmatpush1.bf16.msra.mxu0 0
    %1423 = vmatprep.subr.bf16.mxu0 0
    %1424 = vmatpush1.bf16.msra.mxu0 0
    %1425 = vmatprep.subr.bf16.mxu0 0
    %1426 = vmatpush1.bf16.msra.mxu0 0
    %1427 = vmatprep.subr.bf16.mxu0 0
    %1428 = vmatpush1.bf16.msra.mxu0 0
    %1429 = vmatprep.subr.bf16.mxu0 0
    %1430 = vmatpush1.bf16.msra.mxu0 0
    %1431 = vmatprep.subr.bf16.mxu0 0
    %1432 = vmatpush1.bf16.msra.mxu0 0
    %1433 = vmatprep.subr.bf16.mxu0 0
    %1434 = vmatpush1.bf16.msra.mxu0 0
    %1435 = vmatprep.mubr.bf16.mxu0 0
    %1436 = vmatmul.mubr.bf16.gmra.mrb[0].mxu0 %v1395
    %v1437 = vpop.f32.mrb[0].mxu0
    %v1438 = vadd.f32 %v1375, %v1437
    %v1439 = vpop.f32.mrb[0].mxu0
    %v1440 = vpop.f32.mrb[0].mxu0
    %v1441 = vadd.f32 %v1380, %v1440
    %v1442 = vpop.f32.mrb[0].mxu0
    %1443 = vmatprep.mubr.bf16.mxu0 0
    %1444 = vmatmul.mubr.bf16.gmra.mrb[0].mxu0 %v1398
    %v1445 = vpop.f32.mrb[0].mxu0
    %v1446 = vpop.f32.mrb[0].mxu0
    %v1447 = vpop.f32.mrb[0].mxu0
    %v1448 = vpop.f32.mrb[0].mxu0
    %1449 = vdwg.mxu0
    %v1450 = vadd.f32 %v1219, %v1438
    %v1451 = vadd.f32 %v1220, %v1441
    %v1452 = vmax.f32 %v1450, 0.0
    %v1453 = vmax.f32 %v1451, 0.0
    %v1454 = vld [vmem:[%s8] sm:$0xf]
    %v1455 = vld [vmem:[%s8 + $0x4] sm:$0xf]
    %v1456 = vpack.c.bf16 %v1453, %v1452
    %v1457 = vld [vmem:[%s9] sm:$0xff]
    %v1458 = vld [vmem:[%s9 + $0x8] sm:$0xff]
    %1460 = vset.pattern.permute.xlu0 0
    %1461 = vperm.xlu0 %1460, %v1457
    %v1462 = vpop.permute.xlu0 %1461
    %1465 = vset.pattern.permute.xlu0 0
    %1466 = vperm.xlu0 %1465, %v1458
    %v1467 = vpop.permute.xlu0 %1466
    %v1471 = vunpack.c.l.b16 %v1454
    %v1472 = vunpack.c.l.b16 %v1455
    %v1473 = vpack.c.b16 %v1472, %v1471
    %vm1474 = vcmask 130048
    %v1476 = vsel %vm1474, %v1473, 0
    %1478 = vmatprep.subr.bf16.mxu0 0
    %1479 = vmatpush1.bf16.msra.mxu0 %v1456
    %1480 = vmatprep.subr.bf16.mxu0 0
    %1481 = vmatpush1.bf16.msra.mxu0 0
    %1482 = vmatprep.subr.bf16.mxu0 0
    %1483 = vmatpush1.bf16.msra.mxu0 0
    %1484 = vmatprep.subr.bf16.mxu0 0
    %1485 = vmatpush1.bf16.msra.mxu0 0
    %1486 = vmatprep.subr.bf16.mxu0 0
    %1487 = vmatpush1.bf16.msra.mxu0 0
    %1488 = vmatprep.subr.bf16.mxu0 0
    %1489 = vmatpush1.bf16.msra.mxu0 0
    %1490 = vmatprep.subr.bf16.mxu0 0
    %1491 = vmatpush1.bf16.msra.mxu0 0
    %1492 = vmatprep.subr.bf16.mxu0 0
    %1493 = vmatpush1.bf16.msra.mxu0 0
    %1494 = vmatprep.subr.bf16.mxu0 0
    %1495 = vmatpush1.bf16.msra.mxu0 0
    %1496 = vmatprep.subr.bf16.mxu0 0
    %1497 = vmatpush1.bf16.msra.mxu0 0
    %1498 = vmatprep.subr.bf16.mxu0 0
    %1499 = vmatpush1.bf16.msra.mxu0 0
    %1500 = vmatprep.subr.bf16.mxu0 0
    %1501 = vmatpush1.bf16.msra.mxu0 0
    %1502 = vmatprep.subr.bf16.mxu0 0
    %1503 = vmatpush1.bf16.msra.mxu0 0
    %1504 = vmatprep.subr.bf16.mxu0 0
    %1505 = vmatpush1.bf16.msra.mxu0 0
    %1506 = vmatprep.subr.bf16.mxu0 0
    %1507 = vmatpush1.bf16.msra.mxu0 0
    %1508 = vmatprep.subr.bf16.mxu0 0
    %1509 = vmatpush1.bf16.msra.mxu0 0
    %1510 = vmatprep.mubr.bf16.mxu0 0
    %1511 = vmatmul.mubr.bf16.gmra.mrb[0].mxu0 %v1476
    %v1512 = vpop.f32.mrb[0].mxu0
    %v1513 = vadd.f32 %v1462, %v1512
    %v1514 = vpop.f32.mrb[0].mxu0
    %v1515 = vpop.f32.mrb[0].mxu0
    %v1516 = vadd.f32 %v1467, %v1515
    %v1517 = vpop.f32.mrb[0].mxu0
    %1518 = vdwg.mxu0
    %v1519 = vmax.f32 %v1513, 0.0
    %v1520 = vmax.f32 %v1516, 0.0
    %v1521 = vld [vmem:[%s10] sm:$0xf]
    %v1522 = vpack.c.bf16 %v1520, %v1519
    %v1523 = vld [vmem:[%s11] sm:$0xff]
    %1525 = vset.pattern.permute.xlu0 0
    %1526 = vperm.xlu0 %1525, %v1523
    %v1527 = vpop.permute.xlu0 %1526
    %v1530 = vsel %vm1474, %v1521, 0
    %1532 = vmatprep.subr.bf16.mxu0 0
    %1533 = vmatpush1.bf16.msra.mxu0 %v1522
    %1534 = vmatprep.subr.bf16.mxu0 0
    %1535 = vmatpush1.bf16.msra.mxu0 0
    %1536 = vmatprep.subr.bf16.mxu0 0
    %1537 = vmatpush1.bf16.msra.mxu0 0
    %1538 = vmatprep.subr.bf16.mxu0 0
    %1539 = vmatpush1.bf16.msra.mxu0 0
    %1540 = vmatprep.subr.bf16.mxu0 0
    %1541 = vmatpush1.bf16.msra.mxu0 0
    %1542 = vmatprep.subr.bf16.mxu0 0
    %1543 = vmatpush1.bf16.msra.mxu0 0
    %1544 = vmatprep.subr.bf16.mxu0 0
    %1545 = vmatpush1.bf16.msra.mxu0 0
    %1546 = vmatprep.subr.bf16.mxu0 0
    %1547 = vmatpush1.bf16.msra.mxu0 0
    %1548 = vmatprep.subr.bf16.mxu0 0
    %1549 = vmatpush1.bf16.msra.mxu0 0
    %1550 = vmatprep.subr.bf16.mxu0 0
    %1551 = vmatpush1.bf16.msra.mxu0 0
    %1552 = vmatprep.subr.bf16.mxu0 0
    %1553 = vmatpush1.bf16.msra.mxu0 0
    %1554 = vmatprep.subr.bf16.mxu0 0
    %1555 = vmatpush1.bf16.msra.mxu0 0
    %1556 = vmatprep.subr.bf16.mxu0 0
    %1557 = vmatpush1.bf16.msra.mxu0 0
    %1558 = vmatprep.subr.bf16.mxu0 0
    %1559 = vmatpush1.bf16.msra.mxu0 0
    %1560 = vmatprep.subr.bf16.mxu0 0
    %1561 = vmatpush1.bf16.msra.mxu0 0
    %1562 = vmatprep.subr.bf16.mxu0 0
    %1563 = vmatpush1.bf16.msra.mxu0 0
    %1564 = vmatprep.mubr.bf16.mxu0 0
    %1565 = vmatmul.mubr.bf16.gmra.mrb[0].mxu0 %v1530
    %v1566 = vpop.f32.mrb[0].mxu0
    %v1567 = vadd.f32 %v1527, %v1566
    %v1568 = vpop.f32.mrb[0].mxu0
    %v1569 = vpop.f32.mrb[0].mxu0
    %v1570 = vpop.f32.mrb[0].mxu0
    %1571 = vdwg.mxu0
    %v1572 = vmax.f32 %v1567, 0.0
    %v1573 = vld [vmem:[%s12] sm:$0xff]
    %1575 = vset.pattern.permute.xlu0 0
    %1576 = vperm.xlu0 %1575, %v1573
    %v1577 = vpop.permute.xlu0 %1576
    %v1579 = vmul.f32 %v1577, %v1572
    %v1580 = vrot.slane %v1579, 4
    %v1581 = vadd.f32 %v1579, %v1580
    %v1582 = vrot.slane %v1581, 2
    %v1583 = vadd.f32 %v1581, %v1582
    %v1584 = vrot.slane %v1583, 1
    %v1585 = vadd.f32 %v1583, %v1584
    %v1586 = vld [vmem:[#allocation2] sm:$0x1]
    %1588 = vset.pattern.permute.xlu0 0
    %1589 = vperm.xlu0 %1588, %v1586
    %v1590 = vpop.permute.xlu0 %1589
    %v1592 = vlaneseq
    %v1593 = vshrl.u32 %v1592, 7
    %v1594 = vsub.s32 0, %v1593
    %v1595 = vrot.slane %v1590, %v1594
    %v1596 = vadd.f32 %v1585, %v1595
    %1597 = vst [vmem:[#allocation3] sm:$0x1] %v1596
    // Predicated region
    $region58: #{tpu_custom_call.1} parent=1 // pred_check
      _
    $region59: #{tpu_custom_call.1} parent=1 // pred_check_branch
      %1599 = sbr.rel (0) target = $region61
    $region60: #{tpu_custom_call.1} parent=1 // pred_region
      %s1601 = ssub.s32 16, 16
      %1602 = vsyncadd [#allocation4], %s1601
      %s1604 = sshll.u32 [#allocation3], 4
      %s1605 = int_to_ptr.vmem [resolvable:$true] %s1604
      %1607 = dma.vmem_to_hbm [thread:$0]  %s1605, 16, %s14, [#allocation4]
    $region61: #{tpu_custom_call.1} parent=1 // pred_fallthru
      _
    // Predicated region
    $region62: #{tpu_custom_call.1} parent=1 // pred_check
      _
    $region63: #{tpu_custom_call.1} parent=1 // pred_check_branch
      %1609 = sbr.rel (0) target = $region65
    $region64: #{tpu_custom_call.1} parent=1 // pred_region
      %1610 = dma.done [#allocation4], 16
    $region65: #{tpu_custom_call.1} parent=1 // pred_fallthru
      _
    %1611 = vsyncpa [#allocation4], 1

</llo_original>
